<compile_context>
chip_gen: v5e
topology: v5e:2x2
jax: 0.10.0
libtpu: 0.0.40
codegen_flags: <defaults>
</compile_context>

<pallas_src>
import jax
import jax.numpy as jnp
from jax.experimental import pallas as pl
from jax.experimental.pallas import tpu as pltpu


# ----------------------------------------------------------------------------
# Fused VM_GCN forward kernel.
#   x_ref:    (B*N, 128)   stacked, feature-padded input
#   dadb_ref: (B*N, B*N)   block-diagonal normalized adjacency kron(I_B, DAD)
#   pmat_ref: (B*N, B*N)   batch-pairing matrix, pre-scaled by 1/(B*F_bn),
#                          pmat[r, r'] = 1/(B*F_bn) iff r % N == r' % N
# ----------------------------------------------------------------------------
def _vm_gcn_fused_kernel(dadb_ref, pmat_ref, x_ref,
                         w1_ref, b1_ref, w2_ref, b2_ref, w3_ref, b3_ref,
                         w4_ref, b4_ref, w5_ref, b5_ref, w6_ref, b6_ref,
                         o_ref):
    dadb = dadb_ref[...]

    def gcn(x, w_ref, b_ref, dad_first, act):
        w = w_ref[...]
        if dad_first:                       # Fin <= Fout: hop over smaller dim
            h = jnp.dot(dadb, x, preferred_element_type=jnp.float32)
            h = jnp.dot(h, w, preferred_element_type=jnp.float32)
        else:                               # Fout < Fin
            h = jnp.dot(x, w, preferred_element_type=jnp.float32)
            h = jnp.dot(dadb, h, preferred_element_type=jnp.float32)
        h = h + b_ref[...]                  # (1, Fout) broadcast, rides in VALU
        if act == "relu":
            h = jnp.maximum(h, 0.0)
        elif act == "sigmoid":
            h = jax.nn.sigmoid(h)           # EUP exp
        return h

    x = x_ref[...].astype(jnp.float32)
    x = gcn(x, w1_ref, b1_ref, True, "relu")    # 64(pad 128) -> 128
    x = gcn(x, w2_ref, b2_ref, True, "relu")    # 128 -> 256
    x = gcn(x, w3_ref, b3_ref, True, "relu")    # 256 -> 512

    # --- fused BatchNorm1d over the node channel (batch + feature reduction) ---
    rowsum = jnp.sum(x, axis=1, keepdims=True)        # (B*N, 1) lane reduce
    rowsumsq = jnp.sum(x * x, axis=1, keepdims=True)  # (B*N, 1)
    mean = jnp.dot(pmat_ref[...], rowsum,
                   preferred_element_type=jnp.float32)          # E[x] per node
    ex2 = jnp.dot(pmat_ref[...], rowsumsq,
                  preferred_element_type=jnp.float32)           # E[x^2] per node
    var = ex2 - mean * mean                                     # biased variance
    x = (x - mean) * jax.lax.rsqrt(var + 1e-5)

    x = gcn(x, w4_ref, b4_ref, False, "relu")    # 512 -> 256
    x = gcn(x, w5_ref, b5_ref, False, "relu")    # 256 -> 128
    x = gcn(x, w6_ref, b6_ref, False, "sigmoid") # 128 -> 64 (pad 128)
    o_ref[...] = x.astype(o_ref.dtype)


# ----------------------------------------------------------------------------
# Wrapper: padding, block-diag DAD, pairing matrix, single pallas_call.
# ----------------------------------------------------------------------------
def vm_gcn_forward(x, dad, params):
    B, N, Fin = x.shape
    BN = B * N
    LANE = 128
    (w1, b1), (w2, b2), (w3, b3), (w4, b4), (w5, b5), (w6, b6) = params
    Fout_final = w6.shape[1]
    F_bn = w3.shape[1]          # BatchNorm acts on the GC3 output (width 512)

    # Stack batch and pad the 64-wide input features to a full 128-lane slab.
    x2 = x.reshape(BN, Fin)
    x2 = jnp.pad(x2, ((0, 0), (0, LANE - Fin)))

    # Block-diagonal adjacency so DAD is applied with one matmul for all batches.
    dadb = jnp.kron(jnp.eye(B, dtype=jnp.float32), dad.astype(jnp.float32))

    # Batch-pairing matrix for BatchNorm stats, pre-scaled by 1/(B*F_bn).
    r = jnp.arange(BN)
    pmat = ((r[:, None] % N) == (r[None, :] % N)).astype(jnp.float32) / (B * F_bn)

    # Zero-pad the 64-wide weight dims to 128 lanes (exact: padded parts are 0).
    w1p = jnp.pad(w1, ((0, LANE - w1.shape[0]), (0, 0)))
    w6p = jnp.pad(w6, ((0, 0), (0, LANE - w6.shape[1])))
    b6p = jnp.pad(b6, ((0, 0), (0, LANE - b6.shape[1])))

    vmem_spec = pl.BlockSpec(memory_space=pltpu.MemorySpace.VMEM)
    out_pad = pl.pallas_call(
        _vm_gcn_fused_kernel,
        out_shape=jax.ShapeDtypeStruct((BN, LANE), jnp.float32),
        in_specs=[vmem_spec] * 15,
        out_specs=vmem_spec,
        compiler_params=pltpu.CompilerParams(vmem_limit_bytes=16 * 1024 * 1024),
    )(dadb, pmat, x2,
      w1p, b1, w2, b2, w3, b3, w4, b4, w5, b5, w6p, b6p)

    return out_pad[:, :Fout_final].reshape(B, N, Fout_final)


# ----------------------------------------------------------------------------
# Pure-JAX reference (same math, unfused) for correctness check.
# ----------------------------------------------------------------------------
def vm_gcn_reference(x, dad, params):
    hi = jax.lax.Precision.HIGHEST

    def gcn(x, w, b, act):
        h = jnp.einsum("bnf,fo->bno", x, w, precision=hi)
        h = jnp.einsum("nm,bmo->bno", dad, h, precision=hi)
        h = h + b
        if act == "relu":
            return jnp.maximum(h, 0.0)
        if act == "sigmoid":
            return jax.nn.sigmoid(h)
        return h

    (w1, b1), (w2, b2), (w3, b3), (w4, b4), (w5, b5), (w6, b6) = params
    h = gcn(x, w1, b1, "relu")
    h = gcn(h, w2, b2, "relu")
    h = gcn(h, w3, b3, "relu")
    mean = jnp.mean(h, axis=(0, 2), keepdims=True)
    var = jnp.mean((h - mean) ** 2, axis=(0, 2), keepdims=True)
    h = (h - mean) * jax.lax.rsqrt(var + 1e-5)
    h = gcn(h, w4, b4, "relu")
    h = gcn(h, w5, b5, "relu")
    h = gcn(h, w6, b6, "sigmoid")
    return h


# ----------------------------------------------------------------------------
# Deterministic parameters / adjacency.
# ----------------------------------------------------------------------------
def make_params(key, node_size):
    dims = [64, 128, 256, 512, 256, 128, 64]   # GC1..GC6 in/out chain
    params = []
    for i in range(6):
        fin, fout = dims[i], dims[i + 1]
        key, kw, kb = jax.random.split(key, 3)
        stdv = 1.0 / jnp.sqrt(jnp.float32(fout))
        w = jax.random.uniform(kw, (fin, fout), jnp.float32, -stdv, stdv)
        b = jax.random.uniform(kb, (1, fout), jnp.float32, -stdv, stdv)
        params.append((w, b))
    return params


def make_dad(key, node_size):
    # Symmetric normalized adjacency  D^-1/2 (A + I) D^-1/2, deterministic.
    a = (jax.random.uniform(key, (node_size, node_size)) > 0.7).astype(jnp.float32)
    a = jnp.maximum(a, a.T) + jnp.eye(node_size, dtype=jnp.float32)
    deg = jnp.sum(a, axis=1)
    d_inv_sqrt = 1.0 / jnp.sqrt(deg)
    return a * d_inv_sqrt[:, None] * d_inv_sqrt[None, :]


if __name__ == "__main__":
    NODE_SIZE = 33      # implied by nn.BatchNorm1d(33)
    BATCH = 2
    IN_FEATURES = 64

    key = jax.random.PRNGKey(0)
    k_x, k_dad, k_p = jax.random.split(key, 3)

    x = jax.random.normal(k_x, (BATCH, NODE_SIZE, IN_FEATURES), jnp.float32)
    dad = make_dad(k_dad, NODE_SIZE)
    params = make_params(k_p, NODE_SIZE)

    out = jax.jit(vm_gcn_forward)(x, dad, params)
    out = jax.block_until_ready(out)

    assert out.shape == (BATCH, NODE_SIZE, 64), out.shape
    assert bool(jnp.all(jnp.isfinite(out)))
    assert bool(jnp.all((out >= 0.0) & (out <= 1.0)))   # final sigmoid range

    ref = vm_gcn_reference(x, dad, params)
    max_err = float(jnp.max(jnp.abs(out - ref)))
    assert max_err < 5e-2, f"mismatch vs reference: {max_err}"

    print("KERNEL_OK")
</pallas_src>

<mosaic_0001>
module attributes {stable_mosaic.version = 11 : i64} {
  func.func @_vm_gcn_fused_kernel(%arg0: memref<66x66xf32, #tpu.memory_space<vmem>>, %arg1: memref<66x66xf32, #tpu.memory_space<vmem>>, %arg2: memref<66x128xf32, #tpu.memory_space<vmem>>, %arg3: memref<128x128xf32, #tpu.memory_space<vmem>>, %arg4: memref<1x128xf32, #tpu.memory_space<vmem>>, %arg5: memref<128x256xf32, #tpu.memory_space<vmem>>, %arg6: memref<1x256xf32, #tpu.memory_space<vmem>>, %arg7: memref<256x512xf32, #tpu.memory_space<vmem>>, %arg8: memref<1x512xf32, #tpu.memory_space<vmem>>, %arg9: memref<512x256xf32, #tpu.memory_space<vmem>>, %arg10: memref<1x256xf32, #tpu.memory_space<vmem>>, %arg11: memref<256x128xf32, #tpu.memory_space<vmem>>, %arg12: memref<1x128xf32, #tpu.memory_space<vmem>>, %arg13: memref<128x128xf32, #tpu.memory_space<vmem>>, %arg14: memref<1x128xf32, #tpu.memory_space<vmem>>, %arg15: memref<66x128xf32, #tpu.memory_space<vmem>>) attributes {dimension_semantics = [], scalar_prefetch = 0 : i64, scratch_operands = 0 : i64, tpu.core_type = #tpu.core_type<tc>} {
    %c0 = arith.constant 0 : index
    %c0_0 = arith.constant 0 : index
    %0 = vector.load %arg0[%c0, %c0_0] : memref<66x66xf32, #tpu.memory_space<vmem>>, vector<66x66xf32>
    %c0_1 = arith.constant 0 : index
    %c0_2 = arith.constant 0 : index
    %1 = vector.load %arg2[%c0_1, %c0_2] : memref<66x128xf32, #tpu.memory_space<vmem>>, vector<66x128xf32>
    %c0_3 = arith.constant 0 : index
    %c0_4 = arith.constant 0 : index
    %2 = vector.load %arg3[%c0_3, %c0_4] : memref<128x128xf32, #tpu.memory_space<vmem>>, vector<128x128xf32>
    %cst = arith.constant dense<0.000000e+00> : vector<66x128xf32>
    %3 = tpu.matmul %0, %1, %cst {dimension_numbers = #tpu.dot_dimension_numbers<[1], [0], [0], [1], [0, 0, 1, 1], [], []>} : vector<66x66xf32>, vector<66x128xf32>, vector<66x128xf32> -> vector<66x128xf32>
    %cst_5 = arith.constant dense<0.000000e+00> : vector<66x128xf32>
    %4 = tpu.matmul %3, %2, %cst_5 {dimension_numbers = #tpu.dot_dimension_numbers<[1], [0], [0], [1], [0, 0, 1, 1], [], []>} : vector<66x128xf32>, vector<128x128xf32>, vector<66x128xf32> -> vector<66x128xf32>
    %c0_6 = arith.constant 0 : index
    %c0_7 = arith.constant 0 : index
    %5 = vector.load %arg4[%c0_6, %c0_7] : memref<1x128xf32, #tpu.memory_space<vmem>>, vector<1x128xf32>
    %6 = vector.broadcast %5 : vector<1x128xf32> to vector<66x128xf32>
    %7 = arith.addf %4, %6 : vector<66x128xf32>
    %cst_8 = arith.constant 0.000000e+00 : f32
    %8 = vector.broadcast %cst_8 : f32 to vector<66x128xf32>
    %9 = arith.maximumf %7, %8 : vector<66x128xf32>
    %c0_9 = arith.constant 0 : index
    %c0_10 = arith.constant 0 : index
    %10 = vector.load %arg5[%c0_9, %c0_10] : memref<128x256xf32, #tpu.memory_space<vmem>>, vector<128x256xf32>
    %cst_11 = arith.constant dense<0.000000e+00> : vector<66x128xf32>
    %11 = tpu.matmul %0, %9, %cst_11 {dimension_numbers = #tpu.dot_dimension_numbers<[1], [0], [0], [1], [0, 0, 1, 1], [], []>} : vector<66x66xf32>, vector<66x128xf32>, vector<66x128xf32> -> vector<66x128xf32>
    %cst_12 = arith.constant dense<0.000000e+00> : vector<66x256xf32>
    %12 = tpu.matmul %11, %10, %cst_12 {dimension_numbers = #tpu.dot_dimension_numbers<[1], [0], [0], [1], [0, 0, 1, 1], [], []>} : vector<66x128xf32>, vector<128x256xf32>, vector<66x256xf32> -> vector<66x256xf32>
    %c0_13 = arith.constant 0 : index
    %c0_14 = arith.constant 0 : index
    %13 = vector.load %arg6[%c0_13, %c0_14] : memref<1x256xf32, #tpu.memory_space<vmem>>, vector<1x256xf32>
    %14 = vector.broadcast %13 : vector<1x256xf32> to vector<66x256xf32>
    %15 = arith.addf %12, %14 : vector<66x256xf32>
    %cst_15 = arith.constant 0.000000e+00 : f32
    %16 = vector.broadcast %cst_15 : f32 to vector<66x256xf32>
    %17 = arith.maximumf %15, %16 : vector<66x256xf32>
    %c0_16 = arith.constant 0 : index
    %c0_17 = arith.constant 0 : index
    %18 = vector.load %arg7[%c0_16, %c0_17] : memref<256x512xf32, #tpu.memory_space<vmem>>, vector<256x512xf32>
    %cst_18 = arith.constant dense<0.000000e+00> : vector<66x256xf32>
    %19 = tpu.matmul %0, %17, %cst_18 {dimension_numbers = #tpu.dot_dimension_numbers<[1], [0], [0], [1], [0, 0, 1, 1], [], []>} : vector<66x66xf32>, vector<66x256xf32>, vector<66x256xf32> -> vector<66x256xf32>
    %cst_19 = arith.constant dense<0.000000e+00> : vector<66x512xf32>
    %20 = tpu.matmul %19, %18, %cst_19 {dimension_numbers = #tpu.dot_dimension_numbers<[1], [0], [0], [1], [0, 0, 1, 1], [], []>} : vector<66x256xf32>, vector<256x512xf32>, vector<66x512xf32> -> vector<66x512xf32>
    %c0_20 = arith.constant 0 : index
    %c0_21 = arith.constant 0 : index
    %21 = vector.load %arg8[%c0_20, %c0_21] : memref<1x512xf32, #tpu.memory_space<vmem>>, vector<1x512xf32>
    %22 = vector.broadcast %21 : vector<1x512xf32> to vector<66x512xf32>
    %23 = arith.addf %20, %22 : vector<66x512xf32>
    %cst_22 = arith.constant 0.000000e+00 : f32
    %24 = vector.broadcast %cst_22 : f32 to vector<66x512xf32>
    %25 = arith.maximumf %23, %24 : vector<66x512xf32>
    %cst_23 = arith.constant dense<0.000000e+00> : vector<66xf32>
    %26 = vector.multi_reduction <add>, %25, %cst_23 [1] : vector<66x512xf32> to vector<66xf32>
    %27 = vector.shape_cast %26 : vector<66xf32> to vector<66x1xf32>
    %28 = arith.mulf %25, %25 : vector<66x512xf32>
    %cst_24 = arith.constant dense<0.000000e+00> : vector<66xf32>
    %29 = vector.multi_reduction <add>, %28, %cst_24 [1] : vector<66x512xf32> to vector<66xf32>
    %30 = vector.shape_cast %29 : vector<66xf32> to vector<66x1xf32>
    %c0_25 = arith.constant 0 : index
    %c0_26 = arith.constant 0 : index
    %31 = vector.load %arg1[%c0_25, %c0_26] : memref<66x66xf32, #tpu.memory_space<vmem>>, vector<66x66xf32>
    %cst_27 = arith.constant dense<0.000000e+00> : vector<66x1xf32>
    %32 = tpu.matmul %31, %27, %cst_27 {dimension_numbers = #tpu.dot_dimension_numbers<[1], [0], [0], [1], [0, 0, 1, 1], [], []>} : vector<66x66xf32>, vector<66x1xf32>, vector<66x1xf32> -> vector<66x1xf32>
    %c0_28 = arith.constant 0 : index
    %c0_29 = arith.constant 0 : index
    %33 = vector.load %arg1[%c0_28, %c0_29] : memref<66x66xf32, #tpu.memory_space<vmem>>, vector<66x66xf32>
    %cst_30 = arith.constant dense<0.000000e+00> : vector<66x1xf32>
    %34 = tpu.matmul %33, %30, %cst_30 {dimension_numbers = #tpu.dot_dimension_numbers<[1], [0], [0], [1], [0, 0, 1, 1], [], []>} : vector<66x66xf32>, vector<66x1xf32>, vector<66x1xf32> -> vector<66x1xf32>
    %35 = arith.mulf %32, %32 : vector<66x1xf32>
    %36 = arith.subf %34, %35 : vector<66x1xf32>
    %37 = vector.broadcast %32 : vector<66x1xf32> to vector<66x512xf32>
    %38 = arith.subf %25, %37 : vector<66x512xf32>
    %cst_31 = arith.constant 9.99999974E-6 : f32
    %39 = vector.broadcast %cst_31 : f32 to vector<66x1xf32>
    %40 = arith.addf %36, %39 : vector<66x1xf32>
    %41 = math.rsqrt %40 : vector<66x1xf32>
    %42 = vector.broadcast %41 : vector<66x1xf32> to vector<66x512xf32>
    %43 = arith.mulf %38, %42 : vector<66x512xf32>
    %c0_32 = arith.constant 0 : index
    %c0_33 = arith.constant 0 : index
    %44 = vector.load %arg9[%c0_32, %c0_33] : memref<512x256xf32, #tpu.memory_space<vmem>>, vector<512x256xf32>
    %cst_34 = arith.constant dense<0.000000e+00> : vector<66x256xf32>
    %45 = tpu.matmul %43, %44, %cst_34 {dimension_numbers = #tpu.dot_dimension_numbers<[1], [0], [0], [1], [0, 0, 1, 1], [], []>} : vector<66x512xf32>, vector<512x256xf32>, vector<66x256xf32> -> vector<66x256xf32>
    %cst_35 = arith.constant dense<0.000000e+00> : vector<66x256xf32>
    %46 = tpu.matmul %0, %45, %cst_35 {dimension_numbers = #tpu.dot_dimension_numbers<[1], [0], [0], [1], [0, 0, 1, 1], [], []>} : vector<66x66xf32>, vector<66x256xf32>, vector<66x256xf32> -> vector<66x256xf32>
    %c0_36 = arith.constant 0 : index
    %c0_37 = arith.constant 0 : index
    %47 = vector.load %arg10[%c0_36, %c0_37] : memref<1x256xf32, #tpu.memory_space<vmem>>, vector<1x256xf32>
    %48 = vector.broadcast %47 : vector<1x256xf32> to vector<66x256xf32>
    %49 = arith.addf %46, %48 : vector<66x256xf32>
    %cst_38 = arith.constant 0.000000e+00 : f32
    %50 = vector.broadcast %cst_38 : f32 to vector<66x256xf32>
    %51 = arith.maximumf %49, %50 : vector<66x256xf32>
    %c0_39 = arith.constant 0 : index
    %c0_40 = arith.constant 0 : index
    %52 = vector.load %arg11[%c0_39, %c0_40] : memref<256x128xf32, #tpu.memory_space<vmem>>, vector<256x128xf32>
    %cst_41 = arith.constant dense<0.000000e+00> : vector<66x128xf32>
    %53 = tpu.matmul %51, %52, %cst_41 {dimension_numbers = #tpu.dot_dimension_numbers<[1], [0], [0], [1], [0, 0, 1, 1], [], []>} : vector<66x256xf32>, vector<256x128xf32>, vector<66x128xf32> -> vector<66x128xf32>
    %cst_42 = arith.constant dense<0.000000e+00> : vector<66x128xf32>
    %54 = tpu.matmul %0, %53, %cst_42 {dimension_numbers = #tpu.dot_dimension_numbers<[1], [0], [0], [1], [0, 0, 1, 1], [], []>} : vector<66x66xf32>, vector<66x128xf32>, vector<66x128xf32> -> vector<66x128xf32>
    %c0_43 = arith.constant 0 : index
    %c0_44 = arith.constant 0 : index
    %55 = vector.load %arg12[%c0_43, %c0_44] : memref<1x128xf32, #tpu.memory_space<vmem>>, vector<1x128xf32>
    %56 = vector.broadcast %55 : vector<1x128xf32> to vector<66x128xf32>
    %57 = arith.addf %54, %56 : vector<66x128xf32>
    %cst_45 = arith.constant 0.000000e+00 : f32
    %58 = vector.broadcast %cst_45 : f32 to vector<66x128xf32>
    %59 = arith.maximumf %57, %58 : vector<66x128xf32>
    %c0_46 = arith.constant 0 : index
    %c0_47 = arith.constant 0 : index
    %60 = vector.load %arg13[%c0_46, %c0_47] : memref<128x128xf32, #tpu.memory_space<vmem>>, vector<128x128xf32>
    %cst_48 = arith.constant dense<0.000000e+00> : vector<66x128xf32>
    %61 = tpu.matmul %59, %60, %cst_48 {dimension_numbers = #tpu.dot_dimension_numbers<[1], [0], [0], [1], [0, 0, 1, 1], [], []>} : vector<66x128xf32>, vector<128x128xf32>, vector<66x128xf32> -> vector<66x128xf32>
    %cst_49 = arith.constant dense<0.000000e+00> : vector<66x128xf32>
    %62 = tpu.matmul %0, %61, %cst_49 {dimension_numbers = #tpu.dot_dimension_numbers<[1], [0], [0], [1], [0, 0, 1, 1], [], []>} : vector<66x66xf32>, vector<66x128xf32>, vector<66x128xf32> -> vector<66x128xf32>
    %c0_50 = arith.constant 0 : index
    %c0_51 = arith.constant 0 : index
    %63 = vector.load %arg14[%c0_50, %c0_51] : memref<1x128xf32, #tpu.memory_space<vmem>>, vector<1x128xf32>
    %64 = vector.broadcast %63 : vector<1x128xf32> to vector<66x128xf32>
    %65 = arith.addf %62, %64 : vector<66x128xf32>
    %66 = arith.negf %65 : vector<66x128xf32>
    %67 = math.exp %66 : vector<66x128xf32>
    %cst_52 = arith.constant 1.000000e+00 : f32
    %68 = vector.broadcast %cst_52 : f32 to vector<66x128xf32>
    %69 = arith.addf %68, %67 : vector<66x128xf32>
    %70 = arith.divf %68, %69 : vector<66x128xf32>
    %c0_53 = arith.constant 0 : index
    %c0_54 = arith.constant 0 : index
    %71 = vector.load %arg15[%c0_53, %c0_54] : memref<66x128xf32, #tpu.memory_space<vmem>>, vector<66x128xf32>
    tpu.vector_store %arg15[%c0_53, %c0_54], %70 {strides = array<i32>} : memref<66x128xf32, #tpu.memory_space<vmem>>, vector<66x128xf32>,
    return
  }
}

</mosaic_0001>

<llo_original>
// kernel: vm_gcn_forward.1
$region0: #{vm_gcn_forward.1}
  #allocation0 [shape = 'u32[]', space=smem, size = 0x4, offset = 0x4, fixed_abs, tag = 'smem constant byte address 0x4 - core index']
  #allocation1 [shape = 'u32[72,128]{1,0:T(1,128)}', space=vmem, size = 0x9000, scoped, tag = 'internal scratch']
  %s0 = inlined_call_operand.vmem [shape: f32[66,66], index: 0, kind: input, shape index: {}]
  %s1 = inlined_call_operand.vmem [shape: f32[66,66], index: 1, kind: input, shape index: {}]
  %s2 = inlined_call_operand.vmem [shape: f32[66,128], index: 2, kind: input, shape index: {}]
  %s3 = inlined_call_operand.vmem [shape: f32[128,128], index: 3, kind: input, shape index: {}]
  %s4 = inlined_call_operand.vmem [shape: f32[1,128], index: 4, kind: input, shape index: {}]
  %s5 = inlined_call_operand.vmem [shape: f32[128,256], index: 5, kind: input, shape index: {}]
  %s6 = inlined_call_operand.vmem [shape: f32[1,256], index: 6, kind: input, shape index: {}]
  %s7 = inlined_call_operand.hbm [shape: f32[256,512], index: 7, kind: input, shape index: {}]
  %s8 = inlined_call_operand.vmem [shape: f32[1,512], index: 8, kind: input, shape index: {}]
  %s9 = inlined_call_operand.hbm [shape: f32[512,256], index: 9, kind: input, shape index: {}]
  %s10 = inlined_call_operand.vmem [shape: f32[1,256], index: 10, kind: input, shape index: {}]
  %s11 = inlined_call_operand.vmem [shape: f32[256,128], index: 11, kind: input, shape index: {}]
  %s12 = inlined_call_operand.vmem [shape: f32[1,128], index: 12, kind: input, shape index: {}]
  %s13 = inlined_call_operand.vmem [shape: f32[128,128], index: 13, kind: input, shape index: {}]
  %s14 = inlined_call_operand.vmem [shape: f32[1,128], index: 14, kind: input, shape index: {}]
  %s15 = inlined_call_operand.vmem [shape: f32[66,128], index: 15, kind: output, shape index: {}]
  %s16 = sld [smem:[#allocation0]]
  $region78: #{vm_gcn_forward.1} parent=0
    _
  %s18 = ssub.s32 1, %s16
  %s19 = scalar_select 0, %s18, %s16
  $region1: #{vm_gcn_forward.1} parent=0
    #allocation2 [shape = 'u8[524288]{0}', space=vmem, size = 0x80000, scoped, tag = 'input window, operand 7, single buffered']
    #allocation3 [shape = 's32[1]{0}', space=sflag, size = 0x4, scoped, tag = 'scoped memory for vm_gcn_forward.1']
    #allocation4 [shape = 'u8[524288]{0}', space=vmem, size = 0x80000, scoped, tag = 'input window, operand 9, single buffered']
    #allocation5 [shape = 's32[1]{0}', space=sflag, size = 0x4, scoped, tag = 'scoped memory for vm_gcn_forward.1']
    %20 = vsyncpa [#allocation3], 0
    %21 = vsyncpa [#allocation5], 0
    // Predicated region
    $region2: #{vm_gcn_forward.1} parent=1 // pred_check
      _
    $region3: #{vm_gcn_forward.1} parent=1 // pred_check_branch
      %23 = sbr.rel (0) target = $region5
    $region4: #{vm_gcn_forward.1} parent=1 // pred_region
      _
    $region5: #{vm_gcn_forward.1} parent=1 // pred_fallthru
      _
    // Predicated region
    $region6: #{vm_gcn_forward.1} parent=1 // pred_check
      _
    $region7: #{vm_gcn_forward.1} parent=1 // pred_check_branch
      %25 = sbr.rel (0) target = $region9
    $region8: #{vm_gcn_forward.1} parent=1 // pred_region
      _
    $region9: #{vm_gcn_forward.1} parent=1 // pred_fallthru
      _
    // Predicated region
    $region10: #{vm_gcn_forward.1} parent=1 // pred_check
      _
    $region11: #{vm_gcn_forward.1} parent=1 // pred_check_branch
      %27 = sbr.rel (0) target = $region13
    $region12: #{vm_gcn_forward.1} parent=1 // pred_region
      _
    $region13: #{vm_gcn_forward.1} parent=1 // pred_fallthru
      _
    // Predicated region
    $region14: #{vm_gcn_forward.1} parent=1 // pred_check
      _
    $region15: #{vm_gcn_forward.1} parent=1 // pred_check_branch
      %29 = sbr.rel (0) target = $region17
    $region16: #{vm_gcn_forward.1} parent=1 // pred_region
      _
    $region17: #{vm_gcn_forward.1} parent=1 // pred_fallthru
      _
    // Predicated region
    $region18: #{vm_gcn_forward.1} parent=1 // pred_check
      _
    $region19: #{vm_gcn_forward.1} parent=1 // pred_check_branch
      %31 = sbr.rel (0) target = $region21
    $region20: #{vm_gcn_forward.1} parent=1 // pred_region
      _
    $region21: #{vm_gcn_forward.1} parent=1 // pred_fallthru
      _
    // Predicated region
    $region22: #{vm_gcn_forward.1} parent=1 // pred_check
      _
    $region23: #{vm_gcn_forward.1} parent=1 // pred_check_branch
      %33 = sbr.rel (0) target = $region25
    $region24: #{vm_gcn_forward.1} parent=1 // pred_region
      _
    $region25: #{vm_gcn_forward.1} parent=1 // pred_fallthru
      _
    // Predicated region
    $region26: #{vm_gcn_forward.1} parent=1 // pred_check
      _
    $region27: #{vm_gcn_forward.1} parent=1 // pred_check_branch
      %35 = sbr.rel (0) target = $region29
    $region28: #{vm_gcn_forward.1} parent=1 // pred_region
      _
    $region29: #{vm_gcn_forward.1} parent=1 // pred_fallthru
      _
    // Predicated region
    $region30: #{vm_gcn_forward.1} parent=1 // pred_check
      _
    $region31: #{vm_gcn_forward.1} parent=1 // pred_check_branch
      %37 = sbr.rel (0) target = $region33
    $region32: #{vm_gcn_forward.1} parent=1 // pred_region
      %39 = vsyncadd [#allocation3], 0
      %s40 = sshll.u32 %s7, 4
      %s41 = int_to_ptr.hbm [resolvable:$true] %s40
      %s42 = sshll.u32 [#allocation2], 4
      %s43 = int_to_ptr.vmem [resolvable:$true] %s42
      %48 = dma.hbm_to_vmem [thread:$0]  %s41, 16384, %s43, [#allocation3], 512, 512, 32
    $region33: #{vm_gcn_forward.1} parent=1 // pred_fallthru
      _
    // Predicated region
    $region34: #{vm_gcn_forward.1} parent=1 // pred_check
      _
    $region35: #{vm_gcn_forward.1} parent=1 // pred_check_branch
      %50 = sbr.rel (0) target = $region37
    $region36: #{vm_gcn_forward.1} parent=1 // pred_region
      _
    $region37: #{vm_gcn_forward.1} parent=1 // pred_fallthru
      _
    // Predicated region
    $region38: #{vm_gcn_forward.1} parent=1 // pred_check
      _
    $region39: #{vm_gcn_forward.1} parent=1 // pred_check_branch
      %52 = sbr.rel (0) target = $region41
    $region40: #{vm_gcn_forward.1} parent=1 // pred_region
      %54 = vsyncadd [#allocation5], 0
      %s55 = sshll.u32 %s9, 4
      %s56 = int_to_ptr.hbm [resolvable:$true] %s55
      %s57 = sshll.u32 [#allocation4], 4
      %s58 = int_to_ptr.vmem [resolvable:$true] %s57
      %63 = dma.hbm_to_vmem [thread:$0]  %s56, 16384, %s58, [#allocation5], 256, 256, 16
    $region41: #{vm_gcn_forward.1} parent=1 // pred_fallthru
      _
    // Predicated region
    $region42: #{vm_gcn_forward.1} parent=1 // pred_check
      _
    $region43: #{vm_gcn_forward.1} parent=1 // pred_check_branch
      %65 = sbr.rel (0) target = $region45
    $region44: #{vm_gcn_forward.1} parent=1 // pred_region
      _
    $region45: #{vm_gcn_forward.1} parent=1 // pred_fallthru
      _
    // Predicated region
    $region46: #{vm_gcn_forward.1} parent=1 // pred_check
      _
    $region47: #{vm_gcn_forward.1} parent=1 // pred_check_branch
      %67 = sbr.rel (0) target = $region49
    $region48: #{vm_gcn_forward.1} parent=1 // pred_region
      _
    $region49: #{vm_gcn_forward.1} parent=1 // pred_fallthru
      _
    // Predicated region
    $region50: #{vm_gcn_forward.1} parent=1 // pred_check
      _
    $region51: #{vm_gcn_forward.1} parent=1 // pred_check_branch
      %69 = sbr.rel (0) target = $region53
    $region52: #{vm_gcn_forward.1} parent=1 // pred_region
      _
    $region53: #{vm_gcn_forward.1} parent=1 // pred_fallthru
      _
    // Predicated region
    $region54: #{vm_gcn_forward.1} parent=1 // pred_check
      _
    $region55: #{vm_gcn_forward.1} parent=1 // pred_check_branch
      %71 = sbr.rel (0) target = $region57
    $region56: #{vm_gcn_forward.1} parent=1 // pred_region
      _
    $region57: #{vm_gcn_forward.1} parent=1 // pred_fallthru
      _
    // Predicated region
    $region58: #{vm_gcn_forward.1} parent=1 // pred_check
      _
    $region59: #{vm_gcn_forward.1} parent=1 // pred_check_branch
      %73 = sbr.rel (0) target = $region61
    $region60: #{vm_gcn_forward.1} parent=1 // pred_region
      _
    $region61: #{vm_gcn_forward.1} parent=1 // pred_fallthru
      _
    // Predicated region
    $region62: #{vm_gcn_forward.1} parent=1 // pred_check
      _
    $region63: #{vm_gcn_forward.1} parent=1 // pred_check_branch
      %75 = sbr.rel (0) target = $region65
    $region64: #{vm_gcn_forward.1} parent=1 // pred_region
      %77 = dma.done [#allocation3], 16384
    $region65: #{vm_gcn_forward.1} parent=1 // pred_fallthru
      _
    // Predicated region
    $region66: #{vm_gcn_forward.1} parent=1 // pred_check
      _
    $region67: #{vm_gcn_forward.1} parent=1 // pred_check_branch
      %79 = sbr.rel (0) target = $region69
    $region68: #{vm_gcn_forward.1} parent=1 // pred_region
      %81 = dma.done [#allocation5], 16384
    $region69: #{vm_gcn_forward.1} parent=1 // pred_fallthru
      _
    %v82 = vld [vmem:[%s0] sm:$0xff]
    %v83 = vld [vmem:[%s0 + $0x8] sm:$0xff]
    %v84 = vld [vmem:[%s0 + $0x10] sm:$0xff]
    %v85 = vld [vmem:[%s0 + $0x18] sm:$0xff]
    %v86 = vld [vmem:[%s0 + $0x20] sm:$0xff]
    %v87 = vld [vmem:[%s0 + $0x28] sm:$0xff]
    %v88 = vld [vmem:[%s0 + $0x30] sm:$0xff]
    %v89 = vld [vmem:[%s0 + $0x38] sm:$0xff]
    %v90 = vld [vmem:[%s0 + $0x40] sm:$0x3]
    %v91 = vld [vmem:[%s2] sm:$0xff]
    %v92 = vld [vmem:[%s2 + $0x8] sm:$0xff]
    %v93 = vld [vmem:[%s2 + $0x10] sm:$0xff]
    %v94 = vld [vmem:[%s2 + $0x18] sm:$0xff]
    %v95 = vld [vmem:[%s2 + $0x20] sm:$0xff]
    %v96 = vld [vmem:[%s2 + $0x28] sm:$0xff]
    %v97 = vld [vmem:[%s2 + $0x30] sm:$0xff]
    %v98 = vld [vmem:[%s2 + $0x38] sm:$0xff]
    %v99 = vld [vmem:[%s2 + $0x40] sm:$0x3]
    %v100 = vld [vmem:[%s3] sm:$0xff]
    %v101 = vld [vmem:[%s3 + $0x8] sm:$0xff]
    %v102 = vld [vmem:[%s3 + $0x10] sm:$0xff]
    %v103 = vld [vmem:[%s3 + $0x18] sm:$0xff]
    %v104 = vld [vmem:[%s3 + $0x20] sm:$0xff]
    %v105 = vld [vmem:[%s3 + $0x28] sm:$0xff]
    %v106 = vld [vmem:[%s3 + $0x30] sm:$0xff]
    %v107 = vld [vmem:[%s3 + $0x38] sm:$0xff]
    %v108 = vld [vmem:[%s3 + $0x40] sm:$0xff]
    %v109 = vld [vmem:[%s3 + $0x48] sm:$0xff]
    %v110 = vld [vmem:[%s3 + $0x50] sm:$0xff]
    %v111 = vld [vmem:[%s3 + $0x58] sm:$0xff]
    %v112 = vld [vmem:[%s3 + $0x60] sm:$0xff]
    %v113 = vld [vmem:[%s3 + $0x68] sm:$0xff]
    %v114 = vld [vmem:[%s3 + $0x70] sm:$0xff]
    %v115 = vld [vmem:[%s3 + $0x78] sm:$0xff]
    %vm116 = vcmask 539648
    %v118 = vsel %vm116, %v82, 0
    %v121 = vsel %vm116, %v83, 0
    %v124 = vsel %vm116, %v84, 0
    %v127 = vsel %vm116, %v85, 0
    %v130 = vsel %vm116, %v86, 0
    %v133 = vsel %vm116, %v87, 0
    %v136 = vsel %vm116, %v88, 0
    %v139 = vsel %vm116, %v89, 0
    %v142 = vsel %vm116, %v90, 0
    %vm144 = vcmask 1041408
    %v146 = vsel %vm144, %v99, 0
    %148 = vmatpush.msra.mxu0 0.0
    %149 = vmatpush.msra.mxu0 0.0
    %150 = vmatpush.msra.mxu0 0.0
    %151 = vmatpush.msra.mxu0 0.0
    %152 = vmatpush.msra.mxu0 0.0
    %153 = vmatpush.msra.mxu0 0.0
    %154 = vmatpush.msra.mxu0 0.0
    %155 = vmatpush.msra.mxu0 %v146
    %156 = vmatpush.msra.mxu0 %v98
    %157 = vmatpush.msra.mxu0 %v97
    %158 = vmatpush.msra.mxu0 %v96
    %159 = vmatpush.msra.mxu0 %v95
    %160 = vmatpush.msra.mxu0 %v94
    %161 = vmatpush.msra.mxu0 %v93
    %162 = vmatpush.msra.mxu0 %v92
    %163 = vmatpush.msra.mxu0 %v91
    %164 = vmatmul.f32.gmra.mxu0 %v118
    %v165 = vpop.f32.mrf.mxu0
    %v166 = vadd.f32 0.0, %v165
    %167 = vmatmul.f32.gmra.mxu0 %v121
    %v168 = vpop.f32.mrf.mxu0
    %v169 = vadd.f32 0.0, %v168
    %170 = vmatmul.f32.gmra.mxu0 %v124
    %v171 = vpop.f32.mrf.mxu0
    %v172 = vadd.f32 0.0, %v171
    %173 = vmatmul.f32.gmra.mxu0 %v127
    %v174 = vpop.f32.mrf.mxu0
    %v175 = vadd.f32 0.0, %v174
    %176 = vmatmul.f32.gmra.mxu0 %v130
    %v177 = vpop.f32.mrf.mxu0
    %v178 = vadd.f32 0.0, %v177
    %179 = vmatmul.f32.gmra.mxu0 %v133
    %v180 = vpop.f32.mrf.mxu0
    %v181 = vadd.f32 0.0, %v180
    %182 = vmatmul.f32.gmra.mxu0 %v136
    %v183 = vpop.f32.mrf.mxu0
    %v184 = vadd.f32 0.0, %v183
    %185 = vmatmul.f32.gmra.mxu0 %v139
    %v186 = vpop.f32.mrf.mxu0
    %v187 = vadd.f32 0.0, %v186
    %188 = vmatmul.f32.gmra.mxu0 %v142
    %v189 = vpop.f32.mrf.mxu0
    %v190 = vadd.f32 0.0, %v189
    %191 = vdwg.mxu0
    %v192 = vld [vmem:[%s4] sm:$0x1]
    %v194 = vperm.slane %v192, 0
    %196 = vmatpush.msra.mxu0 %v115
    %197 = vmatpush.msra.mxu0 %v114
    %198 = vmatpush.msra.mxu0 %v113
    %199 = vmatpush.msra.mxu0 %v112
    %200 = vmatpush.msra.mxu0 %v111
    %201 = vmatpush.msra.mxu0 %v110
    %202 = vmatpush.msra.mxu0 %v109
    %203 = vmatpush.msra.mxu0 %v108
    %204 = vmatpush.msra.mxu0 %v107
    %205 = vmatpush.msra.mxu0 %v106
    %206 = vmatpush.msra.mxu0 %v105
    %207 = vmatpush.msra.mxu0 %v104
    %208 = vmatpush.msra.mxu0 %v103
    %209 = vmatpush.msra.mxu0 %v102
    %210 = vmatpush.msra.mxu0 %v101
    %211 = vmatpush.msra.mxu0 %v100
    %212 = vmatmul.f32.gmra.mxu0 %v166
    %v213 = vpop.f32.mrf.mxu0
    %v214 = vadd.f32 %v194, %v213
    %215 = vmatmul.f32.gmra.mxu0 %v169
    %v216 = vpop.f32.mrf.mxu0
    %v217 = vadd.f32 %v194, %v216
    %218 = vmatmul.f32.gmra.mxu0 %v172
    %v219 = vpop.f32.mrf.mxu0
    %v220 = vadd.f32 %v194, %v219
    %221 = vmatmul.f32.gmra.mxu0 %v175
    %v222 = vpop.f32.mrf.mxu0
    %v223 = vadd.f32 %v194, %v222
    %224 = vmatmul.f32.gmra.mxu0 %v178
    %v225 = vpop.f32.mrf.mxu0
    %v226 = vadd.f32 %v194, %v225
    %227 = vmatmul.f32.gmra.mxu0 %v181
    %v228 = vpop.f32.mrf.mxu0
    %v229 = vadd.f32 %v194, %v228
    %230 = vmatmul.f32.gmra.mxu0 %v184
    %v231 = vpop.f32.mrf.mxu0
    %v232 = vadd.f32 %v194, %v231
    %233 = vmatmul.f32.gmra.mxu0 %v187
    %v234 = vpop.f32.mrf.mxu0
    %v235 = vadd.f32 %v194, %v234
    %236 = vmatmul.f32.gmra.mxu0 %v190
    %v237 = vpop.f32.mrf.mxu0
    %v238 = vadd.f32 %v194, %v237
    %239 = vdwg.mxu0
    %v240 = vmax.f32 %v214, 0.0
    %v241 = vmax.f32 %v217, 0.0
    %v242 = vmax.f32 %v220, 0.0
    %v243 = vmax.f32 %v223, 0.0
    %v244 = vmax.f32 %v226, 0.0
    %v245 = vmax.f32 %v229, 0.0
    %v246 = vmax.f32 %v232, 0.0
    %v247 = vmax.f32 %v235, 0.0
    %v248 = vmax.f32 %v238, 0.0
    %v249 = vld [vmem:[%s5] sm:$0xff]
    %v250 = vld [vmem:[%s5 + $0x8] sm:$0xff]
    %v251 = vld [vmem:[%s5 + $0x10] sm:$0xff]
    %v252 = vld [vmem:[%s5 + $0x18] sm:$0xff]
    %v253 = vld [vmem:[%s5 + $0x20] sm:$0xff]
    %v254 = vld [vmem:[%s5 + $0x28] sm:$0xff]
    %v255 = vld [vmem:[%s5 + $0x30] sm:$0xff]
    %v256 = vld [vmem:[%s5 + $0x38] sm:$0xff]
    %v257 = vld [vmem:[%s5 + $0x40] sm:$0xff]
    %v258 = vld [vmem:[%s5 + $0x48] sm:$0xff]
    %v259 = vld [vmem:[%s5 + $0x50] sm:$0xff]
    %v260 = vld [vmem:[%s5 + $0x58] sm:$0xff]
    %v261 = vld [vmem:[%s5 + $0x60] sm:$0xff]
    %v262 = vld [vmem:[%s5 + $0x68] sm:$0xff]
    %v263 = vld [vmem:[%s5 + $0x70] sm:$0xff]
    %v264 = vld [vmem:[%s5 + $0x78] sm:$0xff]
    %v265 = vld [vmem:[%s5 + $0x80] sm:$0xff]
    %v266 = vld [vmem:[%s5 + $0x88] sm:$0xff]
    %v267 = vld [vmem:[%s5 + $0x90] sm:$0xff]
    %v268 = vld [vmem:[%s5 + $0x98] sm:$0xff]
    %v269 = vld [vmem:[%s5 + $0xa0] sm:$0xff]
    %v270 = vld [vmem:[%s5 + $0xa8] sm:$0xff]
    %v271 = vld [vmem:[%s5 + $0xb0] sm:$0xff]
    %v272 = vld [vmem:[%s5 + $0xb8] sm:$0xff]
    %v273 = vld [vmem:[%s5 + $0xc0] sm:$0xff]
    %v274 = vld [vmem:[%s5 + $0xc8] sm:$0xff]
    %v275 = vld [vmem:[%s5 + $0xd0] sm:$0xff]
    %v276 = vld [vmem:[%s5 + $0xd8] sm:$0xff]
    %v277 = vld [vmem:[%s5 + $0xe0] sm:$0xff]
    %v278 = vld [vmem:[%s5 + $0xe8] sm:$0xff]
    %v279 = vld [vmem:[%s5 + $0xf0] sm:$0xff]
    %v280 = vld [vmem:[%s5 + $0xf8] sm:$0xff]
    %v282 = vsel %vm144, %v248, 0
    %284 = vmatpush.msra.mxu0 0.0
    %285 = vmatpush.msra.mxu0 0.0
    %286 = vmatpush.msra.mxu0 0.0
    %287 = vmatpush.msra.mxu0 0.0
    %288 = vmatpush.msra.mxu0 0.0
    %289 = vmatpush.msra.mxu0 0.0
    %290 = vmatpush.msra.mxu0 0.0
    %291 = vmatpush.msra.mxu0 %v282
    %292 = vmatpush.msra.mxu0 %v247
    %293 = vmatpush.msra.mxu0 %v246
    %294 = vmatpush.msra.mxu0 %v245
    %295 = vmatpush.msra.mxu0 %v244
    %296 = vmatpush.msra.mxu0 %v243
    %297 = vmatpush.msra.mxu0 %v242
    %298 = vmatpush.msra.mxu0 %v241
    %299 = vmatpush.msra.mxu0 %v240
    %300 = vmatmul.f32.gmra.mxu0 %v118
    %v301 = vpop.f32.mrf.mxu0
    %v302 = vadd.f32 0.0, %v301
    %303 = vmatmul.f32.gmra.mxu0 %v121
    %v304 = vpop.f32.mrf.mxu0
    %v305 = vadd.f32 0.0, %v304
    %306 = vmatmul.f32.gmra.mxu0 %v124
    %v307 = vpop.f32.mrf.mxu0
    %v308 = vadd.f32 0.0, %v307
    %309 = vmatmul.f32.gmra.mxu0 %v127
    %v310 = vpop.f32.mrf.mxu0
    %v311 = vadd.f32 0.0, %v310
    %312 = vmatmul.f32.gmra.mxu0 %v130
    %v313 = vpop.f32.mrf.mxu0
    %v314 = vadd.f32 0.0, %v313
    %315 = vmatmul.f32.gmra.mxu0 %v133
    %v316 = vpop.f32.mrf.mxu0
    %v317 = vadd.f32 0.0, %v316
    %318 = vmatmul.f32.gmra.mxu0 %v136
    %v319 = vpop.f32.mrf.mxu0
    %v320 = vadd.f32 0.0, %v319
    %321 = vmatmul.f32.gmra.mxu0 %v139
    %v322 = vpop.f32.mrf.mxu0
    %v323 = vadd.f32 0.0, %v322
    %324 = vmatmul.f32.gmra.mxu0 %v142
    %v325 = vpop.f32.mrf.mxu0
    %v326 = vadd.f32 0.0, %v325
    %327 = vdwg.mxu0
    %v328 = vld [vmem:[%s6] sm:$0x3]
    %v330 = vperm.slane %v328, 0
    %v331 = vperm.slane %v328, 1
    %334 = vmatpush.msra.mxu0 %v279
    %335 = vmatpush.msra.mxu0 %v277
    %336 = vmatpush.msra.mxu0 %v275
    %337 = vmatpush.msra.mxu0 %v273
    %338 = vmatpush.msra.mxu0 %v271
    %339 = vmatpush.msra.mxu0 %v269
    %340 = vmatpush.msra.mxu0 %v267
    %341 = vmatpush.msra.mxu0 %v265
    %342 = vmatpush.msra.mxu0 %v263
    %343 = vmatpush.msra.mxu0 %v261
    %344 = vmatpush.msra.mxu0 %v259
    %345 = vmatpush.msra.mxu0 %v257
    %346 = vmatpush.msra.mxu0 %v255
    %347 = vmatpush.msra.mxu0 %v253
    %348 = vmatpush.msra.mxu0 %v251
    %349 = vmatpush.msra.mxu0 %v249
    %350 = vmatmul.f32.gmra.mxu0 %v302
    %v351 = vpop.f32.mrf.mxu0
    %v352 = vadd.f32 %v330, %v351
    %353 = vmatmul.f32.gmra.mxu0 %v305
    %v354 = vpop.f32.mrf.mxu0
    %v355 = vadd.f32 %v330, %v354
    %356 = vmatmul.f32.gmra.mxu0 %v308
    %v357 = vpop.f32.mrf.mxu0
    %v358 = vadd.f32 %v330, %v357
    %359 = vmatmul.f32.gmra.mxu0 %v311
    %v360 = vpop.f32.mrf.mxu0
    %v361 = vadd.f32 %v330, %v360
    %362 = vmatmul.f32.gmra.mxu0 %v314
    %v363 = vpop.f32.mrf.mxu0
    %v364 = vadd.f32 %v330, %v363
    %365 = vmatmul.f32.gmra.mxu0 %v317
    %v366 = vpop.f32.mrf.mxu0
    %v367 = vadd.f32 %v330, %v366
    %368 = vmatmul.f32.gmra.mxu0 %v320
    %v369 = vpop.f32.mrf.mxu0
    %v370 = vadd.f32 %v330, %v369
    %371 = vmatmul.f32.gmra.mxu0 %v323
    %v372 = vpop.f32.mrf.mxu0
    %v373 = vadd.f32 %v330, %v372
    %374 = vmatmul.f32.gmra.mxu0 %v326
    %v375 = vpop.f32.mrf.mxu0
    %v376 = vadd.f32 %v330, %v375
    %377 = vdwg.mxu0
    %378 = vmatpush.msra.mxu0 %v280
    %379 = vmatpush.msra.mxu0 %v278
    %380 = vmatpush.msra.mxu0 %v276
    %381 = vmatpush.msra.mxu0 %v274
    %382 = vmatpush.msra.mxu0 %v272
    %383 = vmatpush.msra.mxu0 %v270
    %384 = vmatpush.msra.mxu0 %v268
    %385 = vmatpush.msra.mxu0 %v266
    %386 = vmatpush.msra.mxu0 %v264
    %387 = vmatpush.msra.mxu0 %v262
    %388 = vmatpush.msra.mxu0 %v260
    %389 = vmatpush.msra.mxu0 %v258
    %390 = vmatpush.msra.mxu0 %v256
    %391 = vmatpush.msra.mxu0 %v254
    %392 = vmatpush.msra.mxu0 %v252
    %393 = vmatpush.msra.mxu0 %v250
    %394 = vmatmul.f32.gmra.mxu0 %v302
    %v395 = vpop.f32.mrf.mxu0
    %v396 = vadd.f32 %v331, %v395
    %397 = vmatmul.f32.gmra.mxu0 %v305
    %v398 = vpop.f32.mrf.mxu0
    %v399 = vadd.f32 %v331, %v398
    %400 = vmatmul.f32.gmra.mxu0 %v308
    %v401 = vpop.f32.mrf.mxu0
    %v402 = vadd.f32 %v331, %v401
    %403 = vmatmul.f32.gmra.mxu0 %v311
    %v404 = vpop.f32.mrf.mxu0
    %v405 = vadd.f32 %v331, %v404
    %406 = vmatmul.f32.gmra.mxu0 %v314
    %v407 = vpop.f32.mrf.mxu0
    %v408 = vadd.f32 %v331, %v407
    %409 = vmatmul.f32.gmra.mxu0 %v317
    %v410 = vpop.f32.mrf.mxu0
    %v411 = vadd.f32 %v331, %v410
    %412 = vmatmul.f32.gmra.mxu0 %v320
    %v413 = vpop.f32.mrf.mxu0
    %v414 = vadd.f32 %v331, %v413
    %415 = vmatmul.f32.gmra.mxu0 %v323
    %v416 = vpop.f32.mrf.mxu0
    %v417 = vadd.f32 %v331, %v416
    %418 = vmatmul.f32.gmra.mxu0 %v326
    %v419 = vpop.f32.mrf.mxu0
    %v420 = vadd.f32 %v331, %v419
    %421 = vdwg.mxu0
    %v422 = vmax.f32 %v352, 0.0
    %v423 = vmax.f32 %v396, 0.0
    %v424 = vmax.f32 %v355, 0.0
    %v425 = vmax.f32 %v399, 0.0
    %v426 = vmax.f32 %v358, 0.0
    %v427 = vmax.f32 %v402, 0.0
    %v428 = vmax.f32 %v361, 0.0
    %v429 = vmax.f32 %v405, 0.0
    %v430 = vmax.f32 %v364, 0.0
    %v431 = vmax.f32 %v408, 0.0
    %v432 = vmax.f32 %v367, 0.0
    %v433 = vmax.f32 %v411, 0.0
    %v434 = vmax.f32 %v370, 0.0
    %v435 = vmax.f32 %v414, 0.0
    %v436 = vmax.f32 %v373, 0.0
    %v437 = vmax.f32 %v417, 0.0
    %v438 = vmax.f32 %v376, 0.0
    %v439 = vmax.f32 %v420, 0.0
    %v440 = vld [vmem:[#allocation2] sm:$0xff]
    %v441 = vld [vmem:[#allocation2 + $0x8] sm:$0xff]
    %v442 = vld [vmem:[#allocation2 + $0x10] sm:$0xff]
    %v443 = vld [vmem:[#allocation2 + $0x18] sm:$0xff]
    %v444 = vld [vmem:[#allocation2 + $0x20] sm:$0xff]
    %v445 = vld [vmem:[#allocation2 + $0x28] sm:$0xff]
    %v446 = vld [vmem:[#allocation2 + $0x30] sm:$0xff]
    %v447 = vld [vmem:[#allocation2 + $0x38] sm:$0xff]
    %v448 = vld [vmem:[#allocation2 + $0x40] sm:$0xff]
    %v449 = vld [vmem:[#allocation2 + $0x48] sm:$0xff]
    %v450 = vld [vmem:[#allocation2 + $0x50] sm:$0xff]
    %v451 = vld [vmem:[#allocation2 + $0x58] sm:$0xff]
    %v452 = vld [vmem:[#allocation2 + $0x60] sm:$0xff]
    %v453 = vld [vmem:[#allocation2 + $0x68] sm:$0xff]
    %v454 = vld [vmem:[#allocation2 + $0x70] sm:$0xff]
    %v455 = vld [vmem:[#allocation2 + $0x78] sm:$0xff]
    %v456 = vld [vmem:[#allocation2 + $0x80] sm:$0xff]
    %v457 = vld [vmem:[#allocation2 + $0x88] sm:$0xff]
    %v458 = vld [vmem:[#allocation2 + $0x90] sm:$0xff]
    %v459 = vld [vmem:[#allocation2 + $0x98] sm:$0xff]
    %v460 = vld [vmem:[#allocation2 + $0xa0] sm:$0xff]
    %v461 = vld [vmem:[#allocation2 + $0xa8] sm:$0xff]
    %v462 = vld [vmem:[#allocation2 + $0xb0] sm:$0xff]
    %v463 = vld [vmem:[#allocation2 + $0xb8] sm:$0xff]
    %v464 = vld [vmem:[#allocation2 + $0xc0] sm:$0xff]
    %v465 = vld [vmem:[#allocation2 + $0xc8] sm:$0xff]
    %v466 = vld [vmem:[#allocation2 + $0xd0] sm:$0xff]
    %v467 = vld [vmem:[#allocation2 + $0xd8] sm:$0xff]
    %v468 = vld [vmem:[#allocation2 + $0xe0] sm:$0xff]
    %v469 = vld [vmem:[#allocation2 + $0xe8] sm:$0xff]
    %v470 = vld [vmem:[#allocation2 + $0xf0] sm:$0xff]
    %v471 = vld [vmem:[#allocation2 + $0xf8] sm:$0xff]
    %v472 = vld [vmem:[#allocation2 + $0x100] sm:$0xff]
    %v473 = vld [vmem:[#allocation2 + $0x108] sm:$0xff]
    %v474 = vld [vmem:[#allocation2 + $0x110] sm:$0xff]
    %v475 = vld [vmem:[#allocation2 + $0x118] sm:$0xff]
    %v476 = vld [vmem:[#allocation2 + $0x120] sm:$0xff]
    %v477 = vld [vmem:[#allocation2 + $0x128] sm:$0xff]
    %v478 = vld [vmem:[#allocation2 + $0x130] sm:$0xff]
    %v479 = vld [vmem:[#allocation2 + $0x138] sm:$0xff]
    %v480 = vld [vmem:[#allocation2 + $0x140] sm:$0xff]
    %v481 = vld [vmem:[#allocation2 + $0x148] sm:$0xff]
    %v482 = vld [vmem:[#allocation2 + $0x150] sm:$0xff]
    %v483 = vld [vmem:[#allocation2 + $0x158] sm:$0xff]
    %v484 = vld [vmem:[#allocation2 + $0x160] sm:$0xff]
    %v485 = vld [vmem:[#allocation2 + $0x168] sm:$0xff]
    %v486 = vld [vmem:[#allocation2 + $0x170] sm:$0xff]
    %v487 = vld [vmem:[#allocation2 + $0x178] sm:$0xff]
    %v488 = vld [vmem:[#allocation2 + $0x180] sm:$0xff]
    %v489 = vld [vmem:[#allocation2 + $0x188] sm:$0xff]
    %v490 = vld [vmem:[#allocation2 + $0x190] sm:$0xff]
    %v491 = vld [vmem:[#allocation2 + $0x198] sm:$0xff]
    %v492 = vld [vmem:[#allocation2 + $0x1a0] sm:$0xff]
    %v493 = vld [vmem:[#allocation2 + $0x1a8] sm:$0xff]
    %v494 = vld [vmem:[#allocation2 + $0x1b0] sm:$0xff]
    %v495 = vld [vmem:[#allocation2 + $0x1b8] sm:$0xff]
    %v496 = vld [vmem:[#allocation2 + $0x1c0] sm:$0xff]
    %v497 = vld [vmem:[#allocation2 + $0x1c8] sm:$0xff]
    %v498 = vld [vmem:[#allocation2 + $0x1d0] sm:$0xff]
    %v499 = vld [vmem:[#allocation2 + $0x1d8] sm:$0xff]
    %v500 = vld [vmem:[#allocation2 + $0x1e0] sm:$0xff]
    %v501 = vld [vmem:[#allocation2 + $0x1e8] sm:$0xff]
    %v502 = vld [vmem:[#allocation2 + $0x1f0] sm:$0xff]
    %v503 = vld [vmem:[#allocation2 + $0x1f8] sm:$0xff]
    %v504 = vld [vmem:[#allocation2 + $0x200] sm:$0xff]
    %v505 = vld [vmem:[#allocation2 + $0x208] sm:$0xff]
    %v506 = vld [vmem:[#allocation2 + $0x210] sm:$0xff]
    %v507 = vld [vmem:[#allocation2 + $0x218] sm:$0xff]
    %v508 = vld [vmem:[#allocation2 + $0x220] sm:$0xff]
    %v509 = vld [vmem:[#allocation2 + $0x228] sm:$0xff]
    %v510 = vld [vmem:[#allocation2 + $0x230] sm:$0xff]
    %v511 = vld [vmem:[#allocation2 + $0x238] sm:$0xff]
    %v512 = vld [vmem:[#allocation2 + $0x240] sm:$0xff]
    %v513 = vld [vmem:[#allocation2 + $0x248] sm:$0xff]
    %v514 = vld [vmem:[#allocation2 + $0x250] sm:$0xff]
    %v515 = vld [vmem:[#allocation2 + $0x258] sm:$0xff]
    %v516 = vld [vmem:[#allocation2 + $0x260] sm:$0xff]
    %v517 = vld [vmem:[#allocation2 + $0x268] sm:$0xff]
    %v518 = vld [vmem:[#allocation2 + $0x270] sm:$0xff]
    %v519 = vld [vmem:[#allocation2 + $0x278] sm:$0xff]
    %v520 = vld [vmem:[#allocation2 + $0x280] sm:$0xff]
    %v521 = vld [vmem:[#allocation2 + $0x288] sm:$0xff]
    %v522 = vld [vmem:[#allocation2 + $0x290] sm:$0xff]
    %v523 = vld [vmem:[#allocation2 + $0x298] sm:$0xff]
    %v524 = vld [vmem:[#allocation2 + $0x2a0] sm:$0xff]
    %v525 = vld [vmem:[#allocation2 + $0x2a8] sm:$0xff]
    %v526 = vld [vmem:[#allocation2 + $0x2b0] sm:$0xff]
    %v527 = vld [vmem:[#allocation2 + $0x2b8] sm:$0xff]
    %v528 = vld [vmem:[#allocation2 + $0x2c0] sm:$0xff]
    %v529 = vld [vmem:[#allocation2 + $0x2c8] sm:$0xff]
    %v530 = vld [vmem:[#allocation2 + $0x2d0] sm:$0xff]
    %v531 = vld [vmem:[#allocation2 + $0x2d8] sm:$0xff]
    %v532 = vld [vmem:[#allocation2 + $0x2e0] sm:$0xff]
    %v533 = vld [vmem:[#allocation2 + $0x2e8] sm:$0xff]
    %v534 = vld [vmem:[#allocation2 + $0x2f0] sm:$0xff]
    %v535 = vld [vmem:[#allocation2 + $0x2f8] sm:$0xff]
    %v536 = vld [vmem:[#allocation2 + $0x300] sm:$0xff]
    %v537 = vld [vmem:[#allocation2 + $0x308] sm:$0xff]
    %v538 = vld [vmem:[#allocation2 + $0x310] sm:$0xff]
    %v539 = vld [vmem:[#allocation2 + $0x318] sm:$0xff]
    %v540 = vld [vmem:[#allocation2 + $0x320] sm:$0xff]
    %v541 = vld [vmem:[#allocation2 + $0x328] sm:$0xff]
    %v542 = vld [vmem:[#allocation2 + $0x330] sm:$0xff]
    %v543 = vld [vmem:[#allocation2 + $0x338] sm:$0xff]
    %v544 = vld [vmem:[#allocation2 + $0x340] sm:$0xff]
    %v545 = vld [vmem:[#allocation2 + $0x348] sm:$0xff]
    %v546 = vld [vmem:[#allocation2 + $0x350] sm:$0xff]
    %v547 = vld [vmem:[#allocation2 + $0x358] sm:$0xff]
    %v548 = vld [vmem:[#allocation2 + $0x360] sm:$0xff]
    %v549 = vld [vmem:[#allocation2 + $0x368] sm:$0xff]
    %v550 = vld [vmem:[#allocation2 + $0x370] sm:$0xff]
    %v551 = vld [vmem:[#allocation2 + $0x378] sm:$0xff]
    %v552 = vld [vmem:[#allocation2 + $0x380] sm:$0xff]
    %v553 = vld [vmem:[#allocation2 + $0x388] sm:$0xff]
    %v554 = vld [vmem:[#allocation2 + $0x390] sm:$0xff]
    %v555 = vld [vmem:[#allocation2 + $0x398] sm:$0xff]
    %v556 = vld [vmem:[#allocation2 + $0x3a0] sm:$0xff]
    %v557 = vld [vmem:[#allocation2 + $0x3a8] sm:$0xff]
    %v558 = vld [vmem:[#allocation2 + $0x3b0] sm:$0xff]
    %v559 = vld [vmem:[#allocation2 + $0x3b8] sm:$0xff]
    %v560 = vld [vmem:[#allocation2 + $0x3c0] sm:$0xff]
    %v561 = vld [vmem:[#allocation2 + $0x3c8] sm:$0xff]
    %v562 = vld [vmem:[#allocation2 + $0x3d0] sm:$0xff]
    %v563 = vld [vmem:[#allocation2 + $0x3d8] sm:$0xff]
    %v564 = vld [vmem:[#allocation2 + $0x3e0] sm:$0xff]
    %v565 = vld [vmem:[#allocation2 + $0x3e8] sm:$0xff]
    %v566 = vld [vmem:[#allocation2 + $0x3f0] sm:$0xff]
    %v567 = vld [vmem:[#allocation2 + $0x3f8] sm:$0xff]
    %v569 = vsel %vm144, %v438, 0
    %v572 = vsel %vm144, %v439, 0
    %574 = vmatpush.msra.mxu0 0.0
    %575 = vmatpush.msra.mxu0 0.0
    %576 = vmatpush.msra.mxu0 0.0
    %577 = vmatpush.msra.mxu0 0.0
    %578 = vmatpush.msra.mxu0 0.0
    %579 = vmatpush.msra.mxu0 0.0
    %580 = vmatpush.msra.mxu0 0.0
    %581 = vmatpush.msra.mxu0 %v569
    %582 = vmatpush.msra.mxu0 %v436
    %583 = vmatpush.msra.mxu0 %v434
    %584 = vmatpush.msra.mxu0 %v432
    %585 = vmatpush.msra.mxu0 %v430
    %586 = vmatpush.msra.mxu0 %v428
    %587 = vmatpush.msra.mxu0 %v426
    %588 = vmatpush.msra.mxu0 %v424
    %589 = vmatpush.msra.mxu0 %v422
    %590 = vmatmul.f32.gmra.mxu0 %v118
    %v591 = vpop.f32.mrf.mxu0
    %v592 = vadd.f32 0.0, %v591
    %593 = vmatmul.f32.gmra.mxu0 %v121
    %v594 = vpop.f32.mrf.mxu0
    %v595 = vadd.f32 0.0, %v594
    %596 = vmatmul.f32.gmra.mxu0 %v124
    %v597 = vpop.f32.mrf.mxu0
    %v598 = vadd.f32 0.0, %v597
    %599 = vmatmul.f32.gmra.mxu0 %v127
    %v600 = vpop.f32.mrf.mxu0
    %v601 = vadd.f32 0.0, %v600
    %602 = vmatmul.f32.gmra.mxu0 %v130
    %v603 = vpop.f32.mrf.mxu0
    %v604 = vadd.f32 0.0, %v603
    %605 = vmatmul.f32.gmra.mxu0 %v133
    %v606 = vpop.f32.mrf.mxu0
    %v607 = vadd.f32 0.0, %v606
    %608 = vmatmul.f32.gmra.mxu0 %v136
    %v609 = vpop.f32.mrf.mxu0
    %v610 = vadd.f32 0.0, %v609
    %611 = vmatmul.f32.gmra.mxu0 %v139
    %v612 = vpop.f32.mrf.mxu0
    %v613 = vadd.f32 0.0, %v612
    %614 = vmatmul.f32.gmra.mxu0 %v142
    %v615 = vpop.f32.mrf.mxu0
    %v616 = vadd.f32 0.0, %v615
    %617 = vdwg.mxu0
    %618 = vmatpush.msra.mxu0 0.0
    %619 = vmatpush.msra.mxu0 0.0
    %620 = vmatpush.msra.mxu0 0.0
    %621 = vmatpush.msra.mxu0 0.0
    %622 = vmatpush.msra.mxu0 0.0
    %623 = vmatpush.msra.mxu0 0.0
    %624 = vmatpush.msra.mxu0 0.0
    %625 = vmatpush.msra.mxu0 %v572
    %626 = vmatpush.msra.mxu0 %v437
    %627 = vmatpush.msra.mxu0 %v435
    %628 = vmatpush.msra.mxu0 %v433
    %629 = vmatpush.msra.mxu0 %v431
    %630 = vmatpush.msra.mxu0 %v429
    %631 = vmatpush.msra.mxu0 %v427
    %632 = vmatpush.msra.mxu0 %v425
    %633 = vmatpush.msra.mxu0 %v423
    %634 = vmatmul.f32.gmra.mxu0 %v118
    %v635 = vpop.f32.mrf.mxu0
    %v636 = vadd.f32 0.0, %v635
    %637 = vmatmul.f32.gmra.mxu0 %v121
    %v638 = vpop.f32.mrf.mxu0
    %v639 = vadd.f32 0.0, %v638
    %640 = vmatmul.f32.gmra.mxu0 %v124
    %v641 = vpop.f32.mrf.mxu0
    %v642 = vadd.f32 0.0, %v641
    %643 = vmatmul.f32.gmra.mxu0 %v127
    %v644 = vpop.f32.mrf.mxu0
    %v645 = vadd.f32 0.0, %v644
    %646 = vmatmul.f32.gmra.mxu0 %v130
    %v647 = vpop.f32.mrf.mxu0
    %v648 = vadd.f32 0.0, %v647
    %649 = vmatmul.f32.gmra.mxu0 %v133
    %v650 = vpop.f32.mrf.mxu0
    %v651 = vadd.f32 0.0, %v650
    %652 = vmatmul.f32.gmra.mxu0 %v136
    %v653 = vpop.f32.mrf.mxu0
    %v654 = vadd.f32 0.0, %v653
    %655 = vmatmul.f32.gmra.mxu0 %v139
    %v656 = vpop.f32.mrf.mxu0
    %v657 = vadd.f32 0.0, %v656
    %658 = vmatmul.f32.gmra.mxu0 %v142
    %v659 = vpop.f32.mrf.mxu0
    %v660 = vadd.f32 0.0, %v659
    %661 = vdwg.mxu0
    %v662 = vld [vmem:[%s8] sm:$0xf]
    %v664 = vperm.slane %v662, 0
    %v665 = vperm.slane %v662, 1
    %v666 = vperm.slane %v662, 2
    %v667 = vperm.slane %v662, 3
    %672 = vmatpush.msra.mxu0 %v500
    %673 = vmatpush.msra.mxu0 %v496
    %674 = vmatpush.msra.mxu0 %v492
    %675 = vmatpush.msra.mxu0 %v488
    %676 = vmatpush.msra.mxu0 %v484
    %677 = vmatpush.msra.mxu0 %v480
    %678 = vmatpush.msra.mxu0 %v476
    %679 = vmatpush.msra.mxu0 %v472
    %680 = vmatpush.msra.mxu0 %v468
    %681 = vmatpush.msra.mxu0 %v464
    %682 = vmatpush.msra.mxu0 %v460
    %683 = vmatpush.msra.mxu0 %v456
    %684 = vmatpush.msra.mxu0 %v452
    %685 = vmatpush.msra.mxu0 %v448
    %686 = vmatpush.msra.mxu0 %v444
    %687 = vmatpush.msra.mxu0 %v440
    %688 = vmatmul.f32.gmra.mxu0 %v592
    %v689 = vpop.f32.mrf.mxu0
    %v690 = vadd.f32 %v664, %v689
    %691 = vmatmul.f32.gmra.mxu0 %v595
    %v692 = vpop.f32.mrf.mxu0
    %v693 = vadd.f32 %v664, %v692
    %694 = vmatmul.f32.gmra.mxu0 %v598
    %v695 = vpop.f32.mrf.mxu0
    %v696 = vadd.f32 %v664, %v695
    %697 = vmatmul.f32.gmra.mxu0 %v601
    %v698 = vpop.f32.mrf.mxu0
    %v699 = vadd.f32 %v664, %v698
    %700 = vmatmul.f32.gmra.mxu0 %v604
    %v701 = vpop.f32.mrf.mxu0
    %v702 = vadd.f32 %v664, %v701
    %703 = vmatmul.f32.gmra.mxu0 %v607
    %v704 = vpop.f32.mrf.mxu0
    %v705 = vadd.f32 %v664, %v704
    %706 = vmatmul.f32.gmra.mxu0 %v610
    %v707 = vpop.f32.mrf.mxu0
    %v708 = vadd.f32 %v664, %v707
    %709 = vmatmul.f32.gmra.mxu0 %v613
    %v710 = vpop.f32.mrf.mxu0
    %v711 = vadd.f32 %v664, %v710
    %712 = vmatmul.f32.gmra.mxu0 %v616
    %v713 = vpop.f32.mrf.mxu0
    %v714 = vadd.f32 %v664, %v713
    %715 = vdwg.mxu0
    %716 = vmatpush.msra.mxu0 %v564
    %717 = vmatpush.msra.mxu0 %v560
    %718 = vmatpush.msra.mxu0 %v556
    %719 = vmatpush.msra.mxu0 %v552
    %720 = vmatpush.msra.mxu0 %v548
    %721 = vmatpush.msra.mxu0 %v544
    %722 = vmatpush.msra.mxu0 %v540
    %723 = vmatpush.msra.mxu0 %v536
    %724 = vmatpush.msra.mxu0 %v532
    %725 = vmatpush.msra.mxu0 %v528
    %726 = vmatpush.msra.mxu0 %v524
    %727 = vmatpush.msra.mxu0 %v520
    %728 = vmatpush.msra.mxu0 %v516
    %729 = vmatpush.msra.mxu0 %v512
    %730 = vmatpush.msra.mxu0 %v508
    %731 = vmatpush.msra.mxu0 %v504
    %732 = vmatmul.f32.gmra.mxu0 %v636
    %v733 = vpop.f32.mrf.mxu0
    %v734 = vadd.f32 %v690, %v733
    %735 = vmatmul.f32.gmra.mxu0 %v639
    %v736 = vpop.f32.mrf.mxu0
    %v737 = vadd.f32 %v693, %v736
    %738 = vmatmul.f32.gmra.mxu0 %v642
    %v739 = vpop.f32.mrf.mxu0
    %v740 = vadd.f32 %v696, %v739
    %741 = vmatmul.f32.gmra.mxu0 %v645
    %v742 = vpop.f32.mrf.mxu0
    %v743 = vadd.f32 %v699, %v742
    %744 = vmatmul.f32.gmra.mxu0 %v648
    %v745 = vpop.f32.mrf.mxu0
    %v746 = vadd.f32 %v702, %v745
    %747 = vmatmul.f32.gmra.mxu0 %v651
    %v748 = vpop.f32.mrf.mxu0
    %v749 = vadd.f32 %v705, %v748
    %750 = vmatmul.f32.gmra.mxu0 %v654
    %v751 = vpop.f32.mrf.mxu0
    %v752 = vadd.f32 %v708, %v751
    %753 = vmatmul.f32.gmra.mxu0 %v657
    %v754 = vpop.f32.mrf.mxu0
    %v755 = vadd.f32 %v711, %v754
    %756 = vmatmul.f32.gmra.mxu0 %v660
    %v757 = vpop.f32.mrf.mxu0
    %v758 = vadd.f32 %v714, %v757
    %759 = vdwg.mxu0
    %760 = vmatpush.msra.mxu0 %v501
    %761 = vmatpush.msra.mxu0 %v497
    %762 = vmatpush.msra.mxu0 %v493
    %763 = vmatpush.msra.mxu0 %v489
    %764 = vmatpush.msra.mxu0 %v485
    %765 = vmatpush.msra.mxu0 %v481
    %766 = vmatpush.msra.mxu0 %v477
    %767 = vmatpush.msra.mxu0 %v473
    %768 = vmatpush.msra.mxu0 %v469
    %769 = vmatpush.msra.mxu0 %v465
    %770 = vmatpush.msra.mxu0 %v461
    %771 = vmatpush.msra.mxu0 %v457
    %772 = vmatpush.msra.mxu0 %v453
    %773 = vmatpush.msra.mxu0 %v449
    %774 = vmatpush.msra.mxu0 %v445
    %775 = vmatpush.msra.mxu0 %v441
    %776 = vmatmul.f32.gmra.mxu0 %v592
    %v777 = vpop.f32.mrf.mxu0
    %v778 = vadd.f32 %v665, %v777
    %779 = vmatmul.f32.gmra.mxu0 %v595
    %v780 = vpop.f32.mrf.mxu0
    %v781 = vadd.f32 %v665, %v780
    %782 = vmatmul.f32.gmra.mxu0 %v598
    %v783 = vpop.f32.mrf.mxu0
    %v784 = vadd.f32 %v665, %v783
    %785 = vmatmul.f32.gmra.mxu0 %v601
    %v786 = vpop.f32.mrf.mxu0
    %v787 = vadd.f32 %v665, %v786
    %788 = vmatmul.f32.gmra.mxu0 %v604
    %v789 = vpop.f32.mrf.mxu0
    %v790 = vadd.f32 %v665, %v789
    %791 = vmatmul.f32.gmra.mxu0 %v607
    %v792 = vpop.f32.mrf.mxu0
    %v793 = vadd.f32 %v665, %v792
    %794 = vmatmul.f32.gmra.mxu0 %v610
    %v795 = vpop.f32.mrf.mxu0
    %v796 = vadd.f32 %v665, %v795
    %797 = vmatmul.f32.gmra.mxu0 %v613
    %v798 = vpop.f32.mrf.mxu0
    %v799 = vadd.f32 %v665, %v798
    %800 = vmatmul.f32.gmra.mxu0 %v616
    %v801 = vpop.f32.mrf.mxu0
    %v802 = vadd.f32 %v665, %v801
    %803 = vdwg.mxu0
    %804 = vmatpush.msra.mxu0 %v565
    %805 = vmatpush.msra.mxu0 %v561
    %806 = vmatpush.msra.mxu0 %v557
    %807 = vmatpush.msra.mxu0 %v553
    %808 = vmatpush.msra.mxu0 %v549
    %809 = vmatpush.msra.mxu0 %v545
    %810 = vmatpush.msra.mxu0 %v541
    %811 = vmatpush.msra.mxu0 %v537
    %812 = vmatpush.msra.mxu0 %v533
    %813 = vmatpush.msra.mxu0 %v529
    %814 = vmatpush.msra.mxu0 %v525
    %815 = vmatpush.msra.mxu0 %v521
    %816 = vmatpush.msra.mxu0 %v517
    %817 = vmatpush.msra.mxu0 %v513
    %818 = vmatpush.msra.mxu0 %v509
    %819 = vmatpush.msra.mxu0 %v505
    %820 = vmatmul.f32.gmra.mxu0 %v636
    %v821 = vpop.f32.mrf.mxu0
    %v822 = vadd.f32 %v778, %v821
    %823 = vmatmul.f32.gmra.mxu0 %v639
    %v824 = vpop.f32.mrf.mxu0
    %v825 = vadd.f32 %v781, %v824
    %826 = vmatmul.f32.gmra.mxu0 %v642
    %v827 = vpop.f32.mrf.mxu0
    %v828 = vadd.f32 %v784, %v827
    %829 = vmatmul.f32.gmra.mxu0 %v645
    %v830 = vpop.f32.mrf.mxu0
    %v831 = vadd.f32 %v787, %v830
    %832 = vmatmul.f32.gmra.mxu0 %v648
    %v833 = vpop.f32.mrf.mxu0
    %v834 = vadd.f32 %v790, %v833
    %835 = vmatmul.f32.gmra.mxu0 %v651
    %v836 = vpop.f32.mrf.mxu0
    %v837 = vadd.f32 %v793, %v836
    %838 = vmatmul.f32.gmra.mxu0 %v654
    %v839 = vpop.f32.mrf.mxu0
    %v840 = vadd.f32 %v796, %v839
    %841 = vmatmul.f32.gmra.mxu0 %v657
    %v842 = vpop.f32.mrf.mxu0
    %v843 = vadd.f32 %v799, %v842
    %844 = vmatmul.f32.gmra.mxu0 %v660
    %v845 = vpop.f32.mrf.mxu0
    %v846 = vadd.f32 %v802, %v845
    %847 = vdwg.mxu0
    %848 = vmatpush.msra.mxu0 %v502
    %849 = vmatpush.msra.mxu0 %v498
    %850 = vmatpush.msra.mxu0 %v494
    %851 = vmatpush.msra.mxu0 %v490
    %852 = vmatpush.msra.mxu0 %v486
    %853 = vmatpush.msra.mxu0 %v482
    %854 = vmatpush.msra.mxu0 %v478
    %855 = vmatpush.msra.mxu0 %v474
    %856 = vmatpush.msra.mxu0 %v470
    %857 = vmatpush.msra.mxu0 %v466
    %858 = vmatpush.msra.mxu0 %v462
    %859 = vmatpush.msra.mxu0 %v458
    %860 = vmatpush.msra.mxu0 %v454
    %861 = vmatpush.msra.mxu0 %v450
    %862 = vmatpush.msra.mxu0 %v446
    %863 = vmatpush.msra.mxu0 %v442
    %864 = vmatmul.f32.gmra.mxu0 %v592
    %v865 = vpop.f32.mrf.mxu0
    %v866 = vadd.f32 %v666, %v865
    %867 = vmatmul.f32.gmra.mxu0 %v595
    %v868 = vpop.f32.mrf.mxu0
    %v869 = vadd.f32 %v666, %v868
    %870 = vmatmul.f32.gmra.mxu0 %v598
    %v871 = vpop.f32.mrf.mxu0
    %v872 = vadd.f32 %v666, %v871
    %873 = vmatmul.f32.gmra.mxu0 %v601
    %v874 = vpop.f32.mrf.mxu0
    %v875 = vadd.f32 %v666, %v874
    %876 = vmatmul.f32.gmra.mxu0 %v604
    %v877 = vpop.f32.mrf.mxu0
    %v878 = vadd.f32 %v666, %v877
    %879 = vmatmul.f32.gmra.mxu0 %v607
    %v880 = vpop.f32.mrf.mxu0
    %v881 = vadd.f32 %v666, %v880
    %882 = vmatmul.f32.gmra.mxu0 %v610
    %v883 = vpop.f32.mrf.mxu0
    %v884 = vadd.f32 %v666, %v883
    %885 = vmatmul.f32.gmra.mxu0 %v613
    %v886 = vpop.f32.mrf.mxu0
    %v887 = vadd.f32 %v666, %v886
    %888 = vmatmul.f32.gmra.mxu0 %v616
    %v889 = vpop.f32.mrf.mxu0
    %v890 = vadd.f32 %v666, %v889
    %891 = vdwg.mxu0
    %892 = vmatpush.msra.mxu0 %v566
    %893 = vmatpush.msra.mxu0 %v562
    %894 = vmatpush.msra.mxu0 %v558
    %895 = vmatpush.msra.mxu0 %v554
    %896 = vmatpush.msra.mxu0 %v550
    %897 = vmatpush.msra.mxu0 %v546
    %898 = vmatpush.msra.mxu0 %v542
    %899 = vmatpush.msra.mxu0 %v538
    %900 = vmatpush.msra.mxu0 %v534
    %901 = vmatpush.msra.mxu0 %v530
    %902 = vmatpush.msra.mxu0 %v526
    %903 = vmatpush.msra.mxu0 %v522
    %904 = vmatpush.msra.mxu0 %v518
    %905 = vmatpush.msra.mxu0 %v514
    %906 = vmatpush.msra.mxu0 %v510
    %907 = vmatpush.msra.mxu0 %v506
    %908 = vmatmul.f32.gmra.mxu0 %v636
    %v909 = vpop.f32.mrf.mxu0
    %v910 = vadd.f32 %v866, %v909
    %911 = vmatmul.f32.gmra.mxu0 %v639
    %v912 = vpop.f32.mrf.mxu0
    %v913 = vadd.f32 %v869, %v912
    %914 = vmatmul.f32.gmra.mxu0 %v642
    %v915 = vpop.f32.mrf.mxu0
    %v916 = vadd.f32 %v872, %v915
    %917 = vmatmul.f32.gmra.mxu0 %v645
    %v918 = vpop.f32.mrf.mxu0
    %v919 = vadd.f32 %v875, %v918
    %920 = vmatmul.f32.gmra.mxu0 %v648
    %v921 = vpop.f32.mrf.mxu0
    %v922 = vadd.f32 %v878, %v921
    %923 = vmatmul.f32.gmra.mxu0 %v651
    %v924 = vpop.f32.mrf.mxu0
    %v925 = vadd.f32 %v881, %v924
    %926 = vmatmul.f32.gmra.mxu0 %v654
    %v927 = vpop.f32.mrf.mxu0
    %v928 = vadd.f32 %v884, %v927
    %929 = vmatmul.f32.gmra.mxu0 %v657
    %v930 = vpop.f32.mrf.mxu0
    %v931 = vadd.f32 %v887, %v930
    %932 = vmatmul.f32.gmra.mxu0 %v660
    %v933 = vpop.f32.mrf.mxu0
    %v934 = vadd.f32 %v890, %v933
    %935 = vdwg.mxu0
    %936 = vmatpush.msra.mxu0 %v503
    %937 = vmatpush.msra.mxu0 %v499
    %938 = vmatpush.msra.mxu0 %v495
    %939 = vmatpush.msra.mxu0 %v491
    %940 = vmatpush.msra.mxu0 %v487
    %941 = vmatpush.msra.mxu0 %v483
    %942 = vmatpush.msra.mxu0 %v479
    %943 = vmatpush.msra.mxu0 %v475
    %944 = vmatpush.msra.mxu0 %v471
    %945 = vmatpush.msra.mxu0 %v467
    %946 = vmatpush.msra.mxu0 %v463
    %947 = vmatpush.msra.mxu0 %v459
    %948 = vmatpush.msra.mxu0 %v455
    %949 = vmatpush.msra.mxu0 %v451
    %950 = vmatpush.msra.mxu0 %v447
    %951 = vmatpush.msra.mxu0 %v443
    %952 = vmatmul.f32.gmra.mxu0 %v592
    %v953 = vpop.f32.mrf.mxu0
    %v954 = vadd.f32 %v667, %v953
    %955 = vmatmul.f32.gmra.mxu0 %v595
    %v956 = vpop.f32.mrf.mxu0
    %v957 = vadd.f32 %v667, %v956
    %958 = vmatmul.f32.gmra.mxu0 %v598
    %v959 = vpop.f32.mrf.mxu0
    %v960 = vadd.f32 %v667, %v959
    %961 = vmatmul.f32.gmra.mxu0 %v601
    %v962 = vpop.f32.mrf.mxu0
    %v963 = vadd.f32 %v667, %v962
    %964 = vmatmul.f32.gmra.mxu0 %v604
    %v965 = vpop.f32.mrf.mxu0
    %v966 = vadd.f32 %v667, %v965
    %967 = vmatmul.f32.gmra.mxu0 %v607
    %v968 = vpop.f32.mrf.mxu0
    %v969 = vadd.f32 %v667, %v968
    %970 = vmatmul.f32.gmra.mxu0 %v610
    %v971 = vpop.f32.mrf.mxu0
    %v972 = vadd.f32 %v667, %v971
    %973 = vmatmul.f32.gmra.mxu0 %v613
    %v974 = vpop.f32.mrf.mxu0
    %v975 = vadd.f32 %v667, %v974
    %976 = vmatmul.f32.gmra.mxu0 %v616
    %v977 = vpop.f32.mrf.mxu0
    %v978 = vadd.f32 %v667, %v977
    %979 = vdwg.mxu0
    %980 = vmatpush.msra.mxu0 %v567
    %981 = vmatpush.msra.mxu0 %v563
    %982 = vmatpush.msra.mxu0 %v559
    %983 = vmatpush.msra.mxu0 %v555
    %984 = vmatpush.msra.mxu0 %v551
    %985 = vmatpush.msra.mxu0 %v547
    %986 = vmatpush.msra.mxu0 %v543
    %987 = vmatpush.msra.mxu0 %v539
    %988 = vmatpush.msra.mxu0 %v535
    %989 = vmatpush.msra.mxu0 %v531
    %990 = vmatpush.msra.mxu0 %v527
    %991 = vmatpush.msra.mxu0 %v523
    %992 = vmatpush.msra.mxu0 %v519
    %993 = vmatpush.msra.mxu0 %v515
    %994 = vmatpush.msra.mxu0 %v511
    %995 = vmatpush.msra.mxu0 %v507
    %996 = vmatmul.f32.gmra.mxu0 %v636
    %v997 = vpop.f32.mrf.mxu0
    %v998 = vadd.f32 %v954, %v997
    %999 = vmatmul.f32.gmra.mxu0 %v639
    %v1000 = vpop.f32.mrf.mxu0
    %v1001 = vadd.f32 %v957, %v1000
    %1002 = vmatmul.f32.gmra.mxu0 %v642
    %v1003 = vpop.f32.mrf.mxu0
    %v1004 = vadd.f32 %v960, %v1003
    %1005 = vmatmul.f32.gmra.mxu0 %v645
    %v1006 = vpop.f32.mrf.mxu0
    %v1007 = vadd.f32 %v963, %v1006
    %1008 = vmatmul.f32.gmra.mxu0 %v648
    %v1009 = vpop.f32.mrf.mxu0
    %v1010 = vadd.f32 %v966, %v1009
    %1011 = vmatmul.f32.gmra.mxu0 %v651
    %v1012 = vpop.f32.mrf.mxu0
    %v1013 = vadd.f32 %v969, %v1012
    %1014 = vmatmul.f32.gmra.mxu0 %v654
    %v1015 = vpop.f32.mrf.mxu0
    %v1016 = vadd.f32 %v972, %v1015
    %1017 = vmatmul.f32.gmra.mxu0 %v657
    %v1018 = vpop.f32.mrf.mxu0
    %v1019 = vadd.f32 %v975, %v1018
    %1020 = vmatmul.f32.gmra.mxu0 %v660
    %v1021 = vpop.f32.mrf.mxu0
    %v1022 = vadd.f32 %v978, %v1021
    %1023 = vdwg.mxu0
    %v1024 = vmax.f32 %v734, 0.0
    %v1025 = vmax.f32 %v822, 0.0
    %v1026 = vmax.f32 %v910, 0.0
    %v1027 = vmax.f32 %v998, 0.0
    %v1028 = vmax.f32 %v737, 0.0
    %v1029 = vmax.f32 %v825, 0.0
    %v1030 = vmax.f32 %v913, 0.0
    %v1031 = vmax.f32 %v1001, 0.0
    %v1032 = vmax.f32 %v740, 0.0
    %v1033 = vmax.f32 %v828, 0.0
    %v1034 = vmax.f32 %v916, 0.0
    %v1035 = vmax.f32 %v1004, 0.0
    %v1036 = vmax.f32 %v743, 0.0
    %v1037 = vmax.f32 %v831, 0.0
    %v1038 = vmax.f32 %v919, 0.0
    %v1039 = vmax.f32 %v1007, 0.0
    %v1040 = vmax.f32 %v746, 0.0
    %v1041 = vmax.f32 %v834, 0.0
    %v1042 = vmax.f32 %v922, 0.0
    %v1043 = vmax.f32 %v1010, 0.0
    %v1044 = vmax.f32 %v749, 0.0
    %v1045 = vmax.f32 %v837, 0.0
    %v1046 = vmax.f32 %v925, 0.0
    %v1047 = vmax.f32 %v1013, 0.0
    %v1048 = vmax.f32 %v752, 0.0
    %v1049 = vmax.f32 %v840, 0.0
    %v1050 = vmax.f32 %v928, 0.0
    %v1051 = vmax.f32 %v1016, 0.0
    %v1052 = vmax.f32 %v755, 0.0
    %v1053 = vmax.f32 %v843, 0.0
    %v1054 = vmax.f32 %v931, 0.0
    %v1055 = vmax.f32 %v1019, 0.0
    %v1056 = vmax.f32 %v758, 0.0
    %v1057 = vmax.f32 %v846, 0.0
    %v1058 = vmax.f32 %v934, 0.0
    %v1059 = vmax.f32 %v1022, 0.0
    %v1060 = vadd.f32 %v1024, %v1025
    %v1061 = vadd.f32 %v1060, %v1026
    %v1062 = vadd.f32 %v1061, %v1027
    %1063 = vadd.xlane.f32.xlu0 %v1062
    %v1064 = vpop.xlane.xlu0 %1063
    %v1065 = vadd.f32 %v1028, %v1029
    %v1066 = vadd.f32 %v1065, %v1030
    %v1067 = vadd.f32 %v1066, %v1031
    %1068 = vadd.xlane.f32.xlu0 %v1067
    %v1069 = vpop.xlane.xlu0 %1068
    %v1070 = vadd.f32 %v1032, %v1033
    %v1071 = vadd.f32 %v1070, %v1034
    %v1072 = vadd.f32 %v1071, %v1035
    %1073 = vadd.xlane.f32.xlu0 %v1072
    %v1074 = vpop.xlane.xlu0 %1073
    %v1075 = vadd.f32 %v1036, %v1037
    %v1076 = vadd.f32 %v1075, %v1038
    %v1077 = vadd.f32 %v1076, %v1039
    %1078 = vadd.xlane.f32.xlu0 %v1077
    %v1079 = vpop.xlane.xlu0 %1078
    %v1080 = vadd.f32 %v1040, %v1041
    %v1081 = vadd.f32 %v1080, %v1042
    %v1082 = vadd.f32 %v1081, %v1043
    %1083 = vadd.xlane.f32.xlu0 %v1082
    %v1084 = vpop.xlane.xlu0 %1083
    %v1085 = vadd.f32 %v1044, %v1045
    %v1086 = vadd.f32 %v1085, %v1046
    %v1087 = vadd.f32 %v1086, %v1047
    %1088 = vadd.xlane.f32.xlu0 %v1087
    %v1089 = vpop.xlane.xlu0 %1088
    %v1090 = vadd.f32 %v1048, %v1049
    %v1091 = vadd.f32 %v1090, %v1050
    %v1092 = vadd.f32 %v1091, %v1051
    %1093 = vadd.xlane.f32.xlu0 %v1092
    %v1094 = vpop.xlane.xlu0 %1093
    %v1095 = vadd.f32 %v1052, %v1053
    %v1096 = vadd.f32 %v1095, %v1054
    %v1097 = vadd.f32 %v1096, %v1055
    %1098 = vadd.xlane.f32.xlu0 %v1097
    %v1099 = vpop.xlane.xlu0 %1098
    %v1100 = vsel %vm144, %v1056, 0.0
    %v1101 = vsel %vm144, %v1057, 0.0
    %v1102 = vadd.f32 %v1100, %v1101
    %v1103 = vsel %vm144, %v1058, 0.0
    %v1104 = vadd.f32 %v1102, %v1103
    %v1105 = vsel %vm144, %v1059, 0.0
    %v1106 = vadd.f32 %v1104, %v1105
    %1107 = vadd.xlane.f32.xlu0 %v1106
    %v1108 = vpop.xlane.xlu0 %1107
    %v1109 = vmul.f32 %v1024, %v1024
    %v1110 = vmul.f32 %v1025, %v1025
    %v1111 = vmul.f32 %v1026, %v1026
    %v1112 = vmul.f32 %v1027, %v1027
    %v1113 = vmul.f32 %v1028, %v1028
    %v1114 = vmul.f32 %v1029, %v1029
    %v1115 = vmul.f32 %v1030, %v1030
    %v1116 = vmul.f32 %v1031, %v1031
    %v1117 = vmul.f32 %v1032, %v1032
    %v1118 = vmul.f32 %v1033, %v1033
    %v1119 = vmul.f32 %v1034, %v1034
    %v1120 = vmul.f32 %v1035, %v1035
    %v1121 = vmul.f32 %v1036, %v1036
    %v1122 = vmul.f32 %v1037, %v1037
    %v1123 = vmul.f32 %v1038, %v1038
    %v1124 = vmul.f32 %v1039, %v1039
    %v1125 = vmul.f32 %v1040, %v1040
    %v1126 = vmul.f32 %v1041, %v1041
    %v1127 = vmul.f32 %v1042, %v1042
    %v1128 = vmul.f32 %v1043, %v1043
    %v1129 = vmul.f32 %v1044, %v1044
    %v1130 = vmul.f32 %v1045, %v1045
    %v1131 = vmul.f32 %v1046, %v1046
    %v1132 = vmul.f32 %v1047, %v1047
    %v1133 = vmul.f32 %v1048, %v1048
    %v1134 = vmul.f32 %v1049, %v1049
    %v1135 = vmul.f32 %v1050, %v1050
    %v1136 = vmul.f32 %v1051, %v1051
    %v1137 = vmul.f32 %v1052, %v1052
    %v1138 = vmul.f32 %v1053, %v1053
    %v1139 = vmul.f32 %v1054, %v1054
    %v1140 = vmul.f32 %v1055, %v1055
    %v1141 = vmul.f32 %v1056, %v1056
    %v1142 = vmul.f32 %v1057, %v1057
    %v1143 = vmul.f32 %v1058, %v1058
    %v1144 = vmul.f32 %v1059, %v1059
    %v1145 = vadd.f32 %v1109, %v1110
    %v1146 = vadd.f32 %v1145, %v1111
    %v1147 = vadd.f32 %v1146, %v1112
    %1148 = vadd.xlane.f32.xlu0 %v1147
    %v1149 = vpop.xlane.xlu0 %1148
    %v1150 = vadd.f32 %v1113, %v1114
    %v1151 = vadd.f32 %v1150, %v1115
    %v1152 = vadd.f32 %v1151, %v1116
    %1153 = vadd.xlane.f32.xlu0 %v1152
    %v1154 = vpop.xlane.xlu0 %1153
    %v1155 = vadd.f32 %v1117, %v1118
    %v1156 = vadd.f32 %v1155, %v1119
    %v1157 = vadd.f32 %v1156, %v1120
    %1158 = vadd.xlane.f32.xlu0 %v1157
    %v1159 = vpop.xlane.xlu0 %1158
    %v1160 = vadd.f32 %v1121, %v1122
    %v1161 = vadd.f32 %v1160, %v1123
    %v1162 = vadd.f32 %v1161, %v1124
    %1163 = vadd.xlane.f32.xlu0 %v1162
    %v1164 = vpop.xlane.xlu0 %1163
    %v1165 = vadd.f32 %v1125, %v1126
    %v1166 = vadd.f32 %v1165, %v1127
    %v1167 = vadd.f32 %v1166, %v1128
    %1168 = vadd.xlane.f32.xlu0 %v1167
    %v1169 = vpop.xlane.xlu0 %1168
    %v1170 = vadd.f32 %v1129, %v1130
    %v1171 = vadd.f32 %v1170, %v1131
    %v1172 = vadd.f32 %v1171, %v1132
    %1173 = vadd.xlane.f32.xlu0 %v1172
    %v1174 = vpop.xlane.xlu0 %1173
    %v1175 = vadd.f32 %v1133, %v1134
    %v1176 = vadd.f32 %v1175, %v1135
    %v1177 = vadd.f32 %v1176, %v1136
    %1178 = vadd.xlane.f32.xlu0 %v1177
    %v1179 = vpop.xlane.xlu0 %1178
    %v1180 = vadd.f32 %v1137, %v1138
    %v1181 = vadd.f32 %v1180, %v1139
    %v1182 = vadd.f32 %v1181, %v1140
    %1183 = vadd.xlane.f32.xlu0 %v1182
    %v1184 = vpop.xlane.xlu0 %1183
    %v1185 = vsel %vm144, %v1141, 0.0
    %v1186 = vsel %vm144, %v1142, 0.0
    %v1187 = vadd.f32 %v1185, %v1186
    %v1188 = vsel %vm144, %v1143, 0.0
    %v1189 = vadd.f32 %v1187, %v1188
    %v1190 = vsel %vm144, %v1144, 0.0
    %v1191 = vadd.f32 %v1189, %v1190
    %1192 = vadd.xlane.f32.xlu0 %v1191
    %v1193 = vpop.xlane.xlu0 %1192
    %v1194 = vld [vmem:[%s1] sm:$0xff]
    %v1195 = vld [vmem:[%s1 + $0x8] sm:$0xff]
    %v1196 = vld [vmem:[%s1 + $0x10] sm:$0xff]
    %v1197 = vld [vmem:[%s1 + $0x18] sm:$0xff]
    %v1198 = vld [vmem:[%s1 + $0x20] sm:$0xff]
    %v1199 = vld [vmem:[%s1 + $0x28] sm:$0xff]
    %v1200 = vld [vmem:[%s1 + $0x30] sm:$0xff]
    %v1201 = vld [vmem:[%s1 + $0x38] sm:$0xff]
    %v1202 = vld [vmem:[%s1 + $0x40] sm:$0x3]
    %v1204 = vsel %vm116, %v1194, 0
    %v1207 = vsel %vm116, %v1195, 0
    %v1210 = vsel %vm116, %v1196, 0
    %v1213 = vsel %vm116, %v1197, 0
    %v1216 = vsel %vm116, %v1198, 0
    %v1219 = vsel %vm116, %v1199, 0
    %v1222 = vsel %vm116, %v1200, 0
    %v1225 = vsel %vm116, %v1201, 0
    %v1228 = vsel %vm116, %v1202, 0
    %v1231 = vsel %vm144, %v1108, 0
    %1233 = vmatpush.msra.mxu0 0.0
    %1234 = vmatpush.msra.mxu0 0.0
    %1235 = vmatpush.msra.mxu0 0.0
    %1236 = vmatpush.msra.mxu0 0.0
    %1237 = vmatpush.msra.mxu0 0.0
    %1238 = vmatpush.msra.mxu0 0.0
    %1239 = vmatpush.msra.mxu0 0.0
    %1240 = vmatpush.msra.mxu0 %v1231
    %1241 = vmatpush.msra.mxu0 %v1099
    %1242 = vmatpush.msra.mxu0 %v1094
    %1243 = vmatpush.msra.mxu0 %v1089
    %1244 = vmatpush.msra.mxu0 %v1084
    %1245 = vmatpush.msra.mxu0 %v1079
    %1246 = vmatpush.msra.mxu0 %v1074
    %1247 = vmatpush.msra.mxu0 %v1069
    %1248 = vmatpush.msra.mxu0 %v1064
    %1249 = vmatmul.f32.gmra.mxu0 %v1204
    %v1250 = vpop.f32.mrf.mxu0
    %v1251 = vadd.f32 0.0, %v1250
    %1252 = vmatmul.f32.gmra.mxu0 %v1207
    %v1253 = vpop.f32.mrf.mxu0
    %v1254 = vadd.f32 0.0, %v1253
    %1255 = vmatmul.f32.gmra.mxu0 %v1210
    %v1256 = vpop.f32.mrf.mxu0
    %v1257 = vadd.f32 0.0, %v1256
    %1258 = vmatmul.f32.gmra.mxu0 %v1213
    %v1259 = vpop.f32.mrf.mxu0
    %v1260 = vadd.f32 0.0, %v1259
    %1261 = vmatmul.f32.gmra.mxu0 %v1216
    %v1262 = vpop.f32.mrf.mxu0
    %v1263 = vadd.f32 0.0, %v1262
    %1264 = vmatmul.f32.gmra.mxu0 %v1219
    %v1265 = vpop.f32.mrf.mxu0
    %v1266 = vadd.f32 0.0, %v1265
    %1267 = vmatmul.f32.gmra.mxu0 %v1222
    %v1268 = vpop.f32.mrf.mxu0
    %v1269 = vadd.f32 0.0, %v1268
    %1270 = vmatmul.f32.gmra.mxu0 %v1225
    %v1271 = vpop.f32.mrf.mxu0
    %v1272 = vadd.f32 0.0, %v1271
    %1273 = vmatmul.f32.gmra.mxu0 %v1228
    %v1274 = vpop.f32.mrf.mxu0
    %v1275 = vadd.f32 0.0, %v1274
    %1276 = vdwg.mxu0
    %v1278 = vsel %vm144, %v1193, 0
    %1280 = vmatpush.msra.mxu0 0.0
    %1281 = vmatpush.msra.mxu0 0.0
    %1282 = vmatpush.msra.mxu0 0.0
    %1283 = vmatpush.msra.mxu0 0.0
    %1284 = vmatpush.msra.mxu0 0.0
    %1285 = vmatpush.msra.mxu0 0.0
    %1286 = vmatpush.msra.mxu0 0.0
    %1287 = vmatpush.msra.mxu0 %v1278
    %1288 = vmatpush.msra.mxu0 %v1184
    %1289 = vmatpush.msra.mxu0 %v1179
    %1290 = vmatpush.msra.mxu0 %v1174
    %1291 = vmatpush.msra.mxu0 %v1169
    %1292 = vmatpush.msra.mxu0 %v1164
    %1293 = vmatpush.msra.mxu0 %v1159
    %1294 = vmatpush.msra.mxu0 %v1154
    %1295 = vmatpush.msra.mxu0 %v1149
    %1296 = vmatmul.f32.gmra.mxu0 %v1204
    %v1297 = vpop.f32.mrf.mxu0
    %v1298 = vadd.f32 0.0, %v1297
    %1299 = vmatmul.f32.gmra.mxu0 %v1207
    %v1300 = vpop.f32.mrf.mxu0
    %v1301 = vadd.f32 0.0, %v1300
    %1302 = vmatmul.f32.gmra.mxu0 %v1210
    %v1303 = vpop.f32.mrf.mxu0
    %v1304 = vadd.f32 0.0, %v1303
    %1305 = vmatmul.f32.gmra.mxu0 %v1213
    %v1306 = vpop.f32.mrf.mxu0
    %v1307 = vadd.f32 0.0, %v1306
    %1308 = vmatmul.f32.gmra.mxu0 %v1216
    %v1309 = vpop.f32.mrf.mxu0
    %v1310 = vadd.f32 0.0, %v1309
    %1311 = vmatmul.f32.gmra.mxu0 %v1219
    %v1312 = vpop.f32.mrf.mxu0
    %v1313 = vadd.f32 0.0, %v1312
    %1314 = vmatmul.f32.gmra.mxu0 %v1222
    %v1315 = vpop.f32.mrf.mxu0
    %v1316 = vadd.f32 0.0, %v1315
    %1317 = vmatmul.f32.gmra.mxu0 %v1225
    %v1318 = vpop.f32.mrf.mxu0
    %v1319 = vadd.f32 0.0, %v1318
    %1320 = vmatmul.f32.gmra.mxu0 %v1228
    %v1321 = vpop.f32.mrf.mxu0
    %v1322 = vadd.f32 0.0, %v1321
    %1323 = vdwg.mxu0
    %v1324 = vmul.f32 %v1251, %v1251
    %v1325 = vmul.f32 %v1254, %v1254
    %v1326 = vmul.f32 %v1257, %v1257
    %v1327 = vmul.f32 %v1260, %v1260
    %v1328 = vmul.f32 %v1263, %v1263
    %v1329 = vmul.f32 %v1266, %v1266
    %v1330 = vmul.f32 %v1269, %v1269
    %v1331 = vmul.f32 %v1272, %v1272
    %v1332 = vmul.f32 %v1275, %v1275
    %v1333 = vsub.f32 %v1298, %v1324
    %v1334 = vsub.f32 %v1301, %v1325
    %v1335 = vsub.f32 %v1304, %v1326
    %v1336 = vsub.f32 %v1307, %v1327
    %v1337 = vsub.f32 %v1310, %v1328
    %v1338 = vsub.f32 %v1313, %v1329
    %v1339 = vsub.f32 %v1316, %v1330
    %v1340 = vsub.f32 %v1319, %v1331
    %v1341 = vsub.f32 %v1322, %v1332
    %1343 = vset.pattern.permute.xlu0 0
    %1344 = vperm.xlu0 %1343, %v1251
    %v1345 = vpop.permute.xlu0 %1344
    %1348 = vset.pattern.permute.xlu0 0
    %1349 = vperm.xlu0 %1348, %v1254
    %v1350 = vpop.permute.xlu0 %1349
    %1353 = vset.pattern.permute.xlu0 0
    %1354 = vperm.xlu0 %1353, %v1257
    %v1355 = vpop.permute.xlu0 %1354
    %1358 = vset.pattern.permute.xlu0 0
    %1359 = vperm.xlu0 %1358, %v1260
    %v1360 = vpop.permute.xlu0 %1359
    %1363 = vset.pattern.permute.xlu0 0
    %1364 = vperm.xlu0 %1363, %v1263
    %v1365 = vpop.permute.xlu0 %1364
    %1368 = vset.pattern.permute.xlu0 0
    %1369 = vperm.xlu0 %1368, %v1266
    %v1370 = vpop.permute.xlu0 %1369
    %1373 = vset.pattern.permute.xlu0 0
    %1374 = vperm.xlu0 %1373, %v1269
    %v1375 = vpop.permute.xlu0 %1374
    %1378 = vset.pattern.permute.xlu0 0
    %1379 = vperm.xlu0 %1378, %v1272
    %v1380 = vpop.permute.xlu0 %1379
    %1383 = vset.pattern.permute.xlu0 0
    %1384 = vperm.xlu0 %1383, %v1275
    %v1385 = vpop.permute.xlu0 %1384
    %v1387 = vsub.f32 %v1024, %v1345
    %v1388 = vsub.f32 %v1025, %v1345
    %v1389 = vsub.f32 %v1026, %v1345
    %v1390 = vsub.f32 %v1027, %v1345
    %v1391 = vsub.f32 %v1028, %v1350
    %v1392 = vsub.f32 %v1029, %v1350
    %v1393 = vsub.f32 %v1030, %v1350
    %v1394 = vsub.f32 %v1031, %v1350
    %v1395 = vsub.f32 %v1032, %v1355
    %v1396 = vsub.f32 %v1033, %v1355
    %v1397 = vsub.f32 %v1034, %v1355
    %v1398 = vsub.f32 %v1035, %v1355
    %v1399 = vsub.f32 %v1036, %v1360
    %v1400 = vsub.f32 %v1037, %v1360
    %v1401 = vsub.f32 %v1038, %v1360
    %v1402 = vsub.f32 %v1039, %v1360
    %v1403 = vsub.f32 %v1040, %v1365
    %v1404 = vsub.f32 %v1041, %v1365
    %v1405 = vsub.f32 %v1042, %v1365
    %v1406 = vsub.f32 %v1043, %v1365
    %v1407 = vsub.f32 %v1044, %v1370
    %v1408 = vsub.f32 %v1045, %v1370
    %v1409 = vsub.f32 %v1046, %v1370
    %v1410 = vsub.f32 %v1047, %v1370
    %v1411 = vsub.f32 %v1048, %v1375
    %v1412 = vsub.f32 %v1049, %v1375
    %v1413 = vsub.f32 %v1050, %v1375
    %v1414 = vsub.f32 %v1051, %v1375
    %v1415 = vsub.f32 %v1052, %v1380
    %v1416 = vsub.f32 %v1053, %v1380
    %v1417 = vsub.f32 %v1054, %v1380
    %v1418 = vsub.f32 %v1055, %v1380
    %v1419 = vsub.f32 %v1056, %v1385
    %v1420 = vsub.f32 %v1057, %v1385
    %v1421 = vsub.f32 %v1058, %v1385
    %v1422 = vsub.f32 %v1059, %v1385
    %v1423 = vadd.f32 %v1333, 1e-05
    %v1424 = vadd.f32 %v1334, 1e-05
    %v1425 = vadd.f32 %v1335, 1e-05
    %v1426 = vadd.f32 %v1336, 1e-05
    %v1427 = vadd.f32 %v1337, 1e-05
    %v1428 = vadd.f32 %v1338, 1e-05
    %v1429 = vadd.f32 %v1339, 1e-05
    %v1430 = vadd.f32 %v1340, 1e-05
    %v1431 = vadd.f32 %v1341, 1e-05
    %v1432 = vrsqrt.pop %v1423
    %v1433 = vmul.f32 %v1432, %v1423
    %v1434 = vmul.f32 %v1433, %v1432
    %v1435 = vmul.f32 0.5, %v1434
    %v1436 = vsub.f32 1.5, %v1435
    %v1437 = vmul.f32 %v1432, %v1436
    %vm1438 = vweird.f32 %v1423
    %vm1439 = vweird.f32 %v1432
    %vm1440 = vmor %vm1438, %vm1439
    %v1441 = vsel %vm1440, %v1432, %v1437
    %v1442 = vrsqrt.pop %v1424
    %v1443 = vmul.f32 %v1442, %v1424
    %v1444 = vmul.f32 %v1443, %v1442
    %v1445 = vmul.f32 0.5, %v1444
    %v1446 = vsub.f32 1.5, %v1445
    %v1447 = vmul.f32 %v1442, %v1446
    %vm1448 = vweird.f32 %v1424
    %vm1449 = vweird.f32 %v1442
    %vm1450 = vmor %vm1448, %vm1449
    %v1451 = vsel %vm1450, %v1442, %v1447
    %v1452 = vrsqrt.pop %v1425
    %v1453 = vmul.f32 %v1452, %v1425
    %v1454 = vmul.f32 %v1453, %v1452
    %v1455 = vmul.f32 0.5, %v1454
    %v1456 = vsub.f32 1.5, %v1455
    %v1457 = vmul.f32 %v1452, %v1456
    %vm1458 = vweird.f32 %v1425
    %vm1459 = vweird.f32 %v1452
    %vm1460 = vmor %vm1458, %vm1459
    %v1461 = vsel %vm1460, %v1452, %v1457
    %v1462 = vrsqrt.pop %v1426
    %v1463 = vmul.f32 %v1462, %v1426
    %v1464 = vmul.f32 %v1463, %v1462
    %v1465 = vmul.f32 0.5, %v1464
    %v1466 = vsub.f32 1.5, %v1465
    %v1467 = vmul.f32 %v1462, %v1466
    %vm1468 = vweird.f32 %v1426
    %vm1469 = vweird.f32 %v1462
    %vm1470 = vmor %vm1468, %vm1469
    %v1471 = vsel %vm1470, %v1462, %v1467
    %v1472 = vrsqrt.pop %v1427
    %v1473 = vmul.f32 %v1472, %v1427
    %v1474 = vmul.f32 %v1473, %v1472
    %v1475 = vmul.f32 0.5, %v1474
    %v1476 = vsub.f32 1.5, %v1475
    %v1477 = vmul.f32 %v1472, %v1476
    %vm1478 = vweird.f32 %v1427
    %vm1479 = vweird.f32 %v1472
    %vm1480 = vmor %vm1478, %vm1479
    %v1481 = vsel %vm1480, %v1472, %v1477
    %v1482 = vrsqrt.pop %v1428
    %v1483 = vmul.f32 %v1482, %v1428
    %v1484 = vmul.f32 %v1483, %v1482
    %v1485 = vmul.f32 0.5, %v1484
    %v1486 = vsub.f32 1.5, %v1485
    %v1487 = vmul.f32 %v1482, %v1486
    %vm1488 = vweird.f32 %v1428
    %vm1489 = vweird.f32 %v1482
    %vm1490 = vmor %vm1488, %vm1489
    %v1491 = vsel %vm1490, %v1482, %v1487
    %v1492 = vrsqrt.pop %v1429
    %v1493 = vmul.f32 %v1492, %v1429
    %v1494 = vmul.f32 %v1493, %v1492
    %v1495 = vmul.f32 0.5, %v1494
    %v1496 = vsub.f32 1.5, %v1495
    %v1497 = vmul.f32 %v1492, %v1496
    %vm1498 = vweird.f32 %v1429
    %vm1499 = vweird.f32 %v1492
    %vm1500 = vmor %vm1498, %vm1499
    %v1501 = vsel %vm1500, %v1492, %v1497
    %v1502 = vrsqrt.pop %v1430
    %v1503 = vmul.f32 %v1502, %v1430
    %v1504 = vmul.f32 %v1503, %v1502
    %v1505 = vmul.f32 0.5, %v1504
    %v1506 = vsub.f32 1.5, %v1505
    %v1507 = vmul.f32 %v1502, %v1506
    %vm1508 = vweird.f32 %v1430
    %vm1509 = vweird.f32 %v1502
    %vm1510 = vmor %vm1508, %vm1509
    %v1511 = vsel %vm1510, %v1502, %v1507
    %v1512 = vrsqrt.pop %v1431
    %v1513 = vmul.f32 %v1512, %v1431
    %v1514 = vmul.f32 %v1513, %v1512
    %v1515 = vmul.f32 0.5, %v1514
    %v1516 = vsub.f32 1.5, %v1515
    %v1517 = vmul.f32 %v1512, %v1516
    %vm1518 = vweird.f32 %v1431
    %vm1519 = vweird.f32 %v1512
    %vm1520 = vmor %vm1518, %vm1519
    %v1521 = vsel %vm1520, %v1512, %v1517
    %1523 = vset.pattern.permute.xlu0 0
    %1524 = vperm.xlu0 %1523, %v1441
    %v1525 = vpop.permute.xlu0 %1524
    %1528 = vset.pattern.permute.xlu0 0
    %1529 = vperm.xlu0 %1528, %v1451
    %v1530 = vpop.permute.xlu0 %1529
    %1533 = vset.pattern.permute.xlu0 0
    %1534 = vperm.xlu0 %1533, %v1461
    %v1535 = vpop.permute.xlu0 %1534
    %1538 = vset.pattern.permute.xlu0 0
    %1539 = vperm.xlu0 %1538, %v1471
    %v1540 = vpop.permute.xlu0 %1539
    %1543 = vset.pattern.permute.xlu0 0
    %1544 = vperm.xlu0 %1543, %v1481
    %v1545 = vpop.permute.xlu0 %1544
    %1548 = vset.pattern.permute.xlu0 0
    %1549 = vperm.xlu0 %1548, %v1491
    %v1550 = vpop.permute.xlu0 %1549
    %1553 = vset.pattern.permute.xlu0 0
    %1554 = vperm.xlu0 %1553, %v1501
    %v1555 = vpop.permute.xlu0 %1554
    %1558 = vset.pattern.permute.xlu0 0
    %1559 = vperm.xlu0 %1558, %v1511
    %v1560 = vpop.permute.xlu0 %1559
    %1563 = vset.pattern.permute.xlu0 0
    %1564 = vperm.xlu0 %1563, %v1521
    %v1565 = vpop.permute.xlu0 %1564
    %v1567 = vmul.f32 %v1387, %v1525
    %v1568 = vmul.f32 %v1388, %v1525
    %v1569 = vmul.f32 %v1389, %v1525
    %v1570 = vmul.f32 %v1390, %v1525
    %v1571 = vmul.f32 %v1391, %v1530
    %v1572 = vmul.f32 %v1392, %v1530
    %v1573 = vmul.f32 %v1393, %v1530
    %v1574 = vmul.f32 %v1394, %v1530
    %v1575 = vmul.f32 %v1395, %v1535
    %v1576 = vmul.f32 %v1396, %v1535
    %v1577 = vmul.f32 %v1397, %v1535
    %v1578 = vmul.f32 %v1398, %v1535
    %v1579 = vmul.f32 %v1399, %v1540
    %v1580 = vmul.f32 %v1400, %v1540
    %v1581 = vmul.f32 %v1401, %v1540
    %v1582 = vmul.f32 %v1402, %v1540
    %v1583 = vmul.f32 %v1403, %v1545
    %v1584 = vmul.f32 %v1404, %v1545
    %v1585 = vmul.f32 %v1405, %v1545
    %v1586 = vmul.f32 %v1406, %v1545
    %v1587 = vmul.f32 %v1407, %v1550
    %v1588 = vmul.f32 %v1408, %v1550
    %v1589 = vmul.f32 %v1409, %v1550
    %v1590 = vmul.f32 %v1410, %v1550
    %v1591 = vmul.f32 %v1411, %v1555
    %v1592 = vmul.f32 %v1412, %v1555
    %v1593 = vmul.f32 %v1413, %v1555
    %v1594 = vmul.f32 %v1414, %v1555
    %v1595 = vmul.f32 %v1415, %v1560
    %v1596 = vmul.f32 %v1416, %v1560
    %v1597 = vmul.f32 %v1417, %v1560
    %v1598 = vmul.f32 %v1418, %v1560
    %v1599 = vmul.f32 %v1419, %v1565
    %v1600 = vmul.f32 %v1420, %v1565
    %v1601 = vmul.f32 %v1421, %v1565
    %v1602 = vmul.f32 %v1422, %v1565
    %v1603 = vld [vmem:[#allocation4] sm:$0xff]
    %v1604 = vld [vmem:[#allocation4 + $0x8] sm:$0xff]
    %v1605 = vld [vmem:[#allocation4 + $0x10] sm:$0xff]
    %v1606 = vld [vmem:[#allocation4 + $0x18] sm:$0xff]
    %v1607 = vld [vmem:[#allocation4 + $0x20] sm:$0xff]
    %v1608 = vld [vmem:[#allocation4 + $0x28] sm:$0xff]
    %v1609 = vld [vmem:[#allocation4 + $0x30] sm:$0xff]
    %v1610 = vld [vmem:[#allocation4 + $0x38] sm:$0xff]
    %v1611 = vld [vmem:[#allocation4 + $0x40] sm:$0xff]
    %v1612 = vld [vmem:[#allocation4 + $0x48] sm:$0xff]
    %v1613 = vld [vmem:[#allocation4 + $0x50] sm:$0xff]
    %v1614 = vld [vmem:[#allocation4 + $0x58] sm:$0xff]
    %v1615 = vld [vmem:[#allocation4 + $0x60] sm:$0xff]
    %v1616 = vld [vmem:[#allocation4 + $0x68] sm:$0xff]
    %v1617 = vld [vmem:[#allocation4 + $0x70] sm:$0xff]
    %v1618 = vld [vmem:[#allocation4 + $0x78] sm:$0xff]
    %v1619 = vld [vmem:[#allocation4 + $0x80] sm:$0xff]
    %v1620 = vld [vmem:[#allocation4 + $0x88] sm:$0xff]
    %v1621 = vld [vmem:[#allocation4 + $0x90] sm:$0xff]
    %v1622 = vld [vmem:[#allocation4 + $0x98] sm:$0xff]
    %v1623 = vld [vmem:[#allocation4 + $0xa0] sm:$0xff]
    %v1624 = vld [vmem:[#allocation4 + $0xa8] sm:$0xff]
    %v1625 = vld [vmem:[#allocation4 + $0xb0] sm:$0xff]
    %v1626 = vld [vmem:[#allocation4 + $0xb8] sm:$0xff]
    %v1627 = vld [vmem:[#allocation4 + $0xc0] sm:$0xff]
    %v1628 = vld [vmem:[#allocation4 + $0xc8] sm:$0xff]
    %v1629 = vld [vmem:[#allocation4 + $0xd0] sm:$0xff]
    %v1630 = vld [vmem:[#allocation4 + $0xd8] sm:$0xff]
    %v1631 = vld [vmem:[#allocation4 + $0xe0] sm:$0xff]
    %v1632 = vld [vmem:[#allocation4 + $0xe8] sm:$0xff]
    %v1633 = vld [vmem:[#allocation4 + $0xf0] sm:$0xff]
    %v1634 = vld [vmem:[#allocation4 + $0xf8] sm:$0xff]
    %v1635 = vld [vmem:[#allocation4 + $0x100] sm:$0xff]
    %v1636 = vld [vmem:[#allocation4 + $0x108] sm:$0xff]
    %v1637 = vld [vmem:[#allocation4 + $0x110] sm:$0xff]
    %v1638 = vld [vmem:[#allocation4 + $0x118] sm:$0xff]
    %v1639 = vld [vmem:[#allocation4 + $0x120] sm:$0xff]
    %v1640 = vld [vmem:[#allocation4 + $0x128] sm:$0xff]
    %v1641 = vld [vmem:[#allocation4 + $0x130] sm:$0xff]
    %v1642 = vld [vmem:[#allocation4 + $0x138] sm:$0xff]
    %v1643 = vld [vmem:[#allocation4 + $0x140] sm:$0xff]
    %v1644 = vld [vmem:[#allocation4 + $0x148] sm:$0xff]
    %v1645 = vld [vmem:[#allocation4 + $0x150] sm:$0xff]
    %v1646 = vld [vmem:[#allocation4 + $0x158] sm:$0xff]
    %v1647 = vld [vmem:[#allocation4 + $0x160] sm:$0xff]
    %v1648 = vld [vmem:[#allocation4 + $0x168] sm:$0xff]
    %v1649 = vld [vmem:[#allocation4 + $0x170] sm:$0xff]
    %v1650 = vld [vmem:[#allocation4 + $0x178] sm:$0xff]
    %v1651 = vld [vmem:[#allocation4 + $0x180] sm:$0xff]
    %v1652 = vld [vmem:[#allocation4 + $0x188] sm:$0xff]
    %v1653 = vld [vmem:[#allocation4 + $0x190] sm:$0xff]
    %v1654 = vld [vmem:[#allocation4 + $0x198] sm:$0xff]
    %v1655 = vld [vmem:[#allocation4 + $0x1a0] sm:$0xff]
    %v1656 = vld [vmem:[#allocation4 + $0x1a8] sm:$0xff]
    %v1657 = vld [vmem:[#allocation4 + $0x1b0] sm:$0xff]
    %v1658 = vld [vmem:[#allocation4 + $0x1b8] sm:$0xff]
    %v1659 = vld [vmem:[#allocation4 + $0x1c0] sm:$0xff]
    %v1660 = vld [vmem:[#allocation4 + $0x1c8] sm:$0xff]
    %v1661 = vld [vmem:[#allocation4 + $0x1d0] sm:$0xff]
    %v1662 = vld [vmem:[#allocation4 + $0x1d8] sm:$0xff]
    %v1663 = vld [vmem:[#allocation4 + $0x1e0] sm:$0xff]
    %v1664 = vld [vmem:[#allocation4 + $0x1e8] sm:$0xff]
    %v1665 = vld [vmem:[#allocation4 + $0x1f0] sm:$0xff]
    %v1666 = vld [vmem:[#allocation4 + $0x1f8] sm:$0xff]
    %v1667 = vld [vmem:[#allocation4 + $0x200] sm:$0xff]
    %v1668 = vld [vmem:[#allocation4 + $0x208] sm:$0xff]
    %v1669 = vld [vmem:[#allocation4 + $0x210] sm:$0xff]
    %v1670 = vld [vmem:[#allocation4 + $0x218] sm:$0xff]
    %v1671 = vld [vmem:[#allocation4 + $0x220] sm:$0xff]
    %v1672 = vld [vmem:[#allocation4 + $0x228] sm:$0xff]
    %v1673 = vld [vmem:[#allocation4 + $0x230] sm:$0xff]
    %v1674 = vld [vmem:[#allocation4 + $0x238] sm:$0xff]
    %v1675 = vld [vmem:[#allocation4 + $0x240] sm:$0xff]
    %v1676 = vld [vmem:[#allocation4 + $0x248] sm:$0xff]
    %v1677 = vld [vmem:[#allocation4 + $0x250] sm:$0xff]
    %v1678 = vld [vmem:[#allocation4 + $0x258] sm:$0xff]
    %v1679 = vld [vmem:[#allocation4 + $0x260] sm:$0xff]
    %v1680 = vld [vmem:[#allocation4 + $0x268] sm:$0xff]
    %v1681 = vld [vmem:[#allocation4 + $0x270] sm:$0xff]
    %v1682 = vld [vmem:[#allocation4 + $0x278] sm:$0xff]
    %v1683 = vld [vmem:[#allocation4 + $0x280] sm:$0xff]
    %v1684 = vld [vmem:[#allocation4 + $0x288] sm:$0xff]
    %v1685 = vld [vmem:[#allocation4 + $0x290] sm:$0xff]
    %v1686 = vld [vmem:[#allocation4 + $0x298] sm:$0xff]
    %v1687 = vld [vmem:[#allocation4 + $0x2a0] sm:$0xff]
    %v1688 = vld [vmem:[#allocation4 + $0x2a8] sm:$0xff]
    %v1689 = vld [vmem:[#allocation4 + $0x2b0] sm:$0xff]
    %v1690 = vld [vmem:[#allocation4 + $0x2b8] sm:$0xff]
    %v1691 = vld [vmem:[#allocation4 + $0x2c0] sm:$0xff]
    %v1692 = vld [vmem:[#allocation4 + $0x2c8] sm:$0xff]
    %v1693 = vld [vmem:[#allocation4 + $0x2d0] sm:$0xff]
    %v1694 = vld [vmem:[#allocation4 + $0x2d8] sm:$0xff]
    %v1695 = vld [vmem:[#allocation4 + $0x2e0] sm:$0xff]
    %v1696 = vld [vmem:[#allocation4 + $0x2e8] sm:$0xff]
    %v1697 = vld [vmem:[#allocation4 + $0x2f0] sm:$0xff]
    %v1698 = vld [vmem:[#allocation4 + $0x2f8] sm:$0xff]
    %v1699 = vld [vmem:[#allocation4 + $0x300] sm:$0xff]
    %v1700 = vld [vmem:[#allocation4 + $0x308] sm:$0xff]
    %v1701 = vld [vmem:[#allocation4 + $0x310] sm:$0xff]
    %v1702 = vld [vmem:[#allocation4 + $0x318] sm:$0xff]
    %v1703 = vld [vmem:[#allocation4 + $0x320] sm:$0xff]
    %v1704 = vld [vmem:[#allocation4 + $0x328] sm:$0xff]
    %v1705 = vld [vmem:[#allocation4 + $0x330] sm:$0xff]
    %v1706 = vld [vmem:[#allocation4 + $0x338] sm:$0xff]
    %v1707 = vld [vmem:[#allocation4 + $0x340] sm:$0xff]
    %v1708 = vld [vmem:[#allocation4 + $0x348] sm:$0xff]
    %v1709 = vld [vmem:[#allocation4 + $0x350] sm:$0xff]
    %v1710 = vld [vmem:[#allocation4 + $0x358] sm:$0xff]
    %v1711 = vld [vmem:[#allocation4 + $0x360] sm:$0xff]
    %v1712 = vld [vmem:[#allocation4 + $0x368] sm:$0xff]
    %v1713 = vld [vmem:[#allocation4 + $0x370] sm:$0xff]
    %v1714 = vld [vmem:[#allocation4 + $0x378] sm:$0xff]
    %v1715 = vld [vmem:[#allocation4 + $0x380] sm:$0xff]
    %v1716 = vld [vmem:[#allocation4 + $0x388] sm:$0xff]
    %v1717 = vld [vmem:[#allocation4 + $0x390] sm:$0xff]
    %v1718 = vld [vmem:[#allocation4 + $0x398] sm:$0xff]
    %v1719 = vld [vmem:[#allocation4 + $0x3a0] sm:$0xff]
    %v1720 = vld [vmem:[#allocation4 + $0x3a8] sm:$0xff]
    %v1721 = vld [vmem:[#allocation4 + $0x3b0] sm:$0xff]
    %v1722 = vld [vmem:[#allocation4 + $0x3b8] sm:$0xff]
    %v1723 = vld [vmem:[#allocation4 + $0x3c0] sm:$0xff]
    %v1724 = vld [vmem:[#allocation4 + $0x3c8] sm:$0xff]
    %v1725 = vld [vmem:[#allocation4 + $0x3d0] sm:$0xff]
    %v1726 = vld [vmem:[#allocation4 + $0x3d8] sm:$0xff]
    %v1727 = vld [vmem:[#allocation4 + $0x3e0] sm:$0xff]
    %v1728 = vld [vmem:[#allocation4 + $0x3e8] sm:$0xff]
    %v1729 = vld [vmem:[#allocation4 + $0x3f0] sm:$0xff]
    %v1730 = vld [vmem:[#allocation4 + $0x3f8] sm:$0xff]
    %1731 = vmatpush.msra.mxu0 %v1633
    %1732 = vmatpush.msra.mxu0 %v1631
    %1733 = vmatpush.msra.mxu0 %v1629
    %1734 = vmatpush.msra.mxu0 %v1627
    %1735 = vmatpush.msra.mxu0 %v1625
    %1736 = vmatpush.msra.mxu0 %v1623
    %1737 = vmatpush.msra.mxu0 %v1621
    %1738 = vmatpush.msra.mxu0 %v1619
    %1739 = vmatpush.msra.mxu0 %v1617
    %1740 = vmatpush.msra.mxu0 %v1615
    %1741 = vmatpush.msra.mxu0 %v1613
    %1742 = vmatpush.msra.mxu0 %v1611
    %1743 = vmatpush.msra.mxu0 %v1609
    %1744 = vmatpush.msra.mxu0 %v1607
    %1745 = vmatpush.msra.mxu0 %v1605
    %1746 = vmatpush.msra.mxu0 %v1603
    %1747 = vmatmul.f32.gmra.mxu0 %v1567
    %v1748 = vpop.f32.mrf.mxu0
    %v1749 = vadd.f32 0.0, %v1748
    %1750 = vmatmul.f32.gmra.mxu0 %v1571
    %v1751 = vpop.f32.mrf.mxu0
    %v1752 = vadd.f32 0.0, %v1751
    %1753 = vmatmul.f32.gmra.mxu0 %v1575
    %v1754 = vpop.f32.mrf.mxu0
    %v1755 = vadd.f32 0.0, %v1754
    %1756 = vmatmul.f32.gmra.mxu0 %v1579
    %v1757 = vpop.f32.mrf.mxu0
    %v1758 = vadd.f32 0.0, %v1757
    %1759 = vmatmul.f32.gmra.mxu0 %v1583
    %v1760 = vpop.f32.mrf.mxu0
    %v1761 = vadd.f32 0.0, %v1760
    %1762 = vmatmul.f32.gmra.mxu0 %v1587
    %v1763 = vpop.f32.mrf.mxu0
    %v1764 = vadd.f32 0.0, %v1763
    %1765 = vmatmul.f32.gmra.mxu0 %v1591
    %v1766 = vpop.f32.mrf.mxu0
    %v1767 = vadd.f32 0.0, %v1766
    %1768 = vmatmul.f32.gmra.mxu0 %v1595
    %v1769 = vpop.f32.mrf.mxu0
    %v1770 = vadd.f32 0.0, %v1769
    %1771 = vmatmul.f32.gmra.mxu0 %v1599
    %v1772 = vpop.f32.mrf.mxu0
    %v1773 = vadd.f32 0.0, %v1772
    %1774 = vdwg.mxu0
    %1775 = vmatpush.msra.mxu0 %v1665
    %1776 = vmatpush.msra.mxu0 %v1663
    %1777 = vmatpush.msra.mxu0 %v1661
    %1778 = vmatpush.msra.mxu0 %v1659
    %1779 = vmatpush.msra.mxu0 %v1657
    %1780 = vmatpush.msra.mxu0 %v1655
    %1781 = vmatpush.msra.mxu0 %v1653
    %1782 = vmatpush.msra.mxu0 %v1651
    %1783 = vmatpush.msra.mxu0 %v1649
    %1784 = vmatpush.msra.mxu0 %v1647
    %1785 = vmatpush.msra.mxu0 %v1645
    %1786 = vmatpush.msra.mxu0 %v1643
    %1787 = vmatpush.msra.mxu0 %v1641
    %1788 = vmatpush.msra.mxu0 %v1639
    %1789 = vmatpush.msra.mxu0 %v1637
    %1790 = vmatpush.msra.mxu0 %v1635
    %1791 = vmatmul.f32.gmra.mxu0 %v1568
    %v1792 = vpop.f32.mrf.mxu0
    %v1793 = vadd.f32 %v1749, %v1792
    %1794 = vmatmul.f32.gmra.mxu0 %v1572
    %v1795 = vpop.f32.mrf.mxu0
    %v1796 = vadd.f32 %v1752, %v1795
    %1797 = vmatmul.f32.gmra.mxu0 %v1576
    %v1798 = vpop.f32.mrf.mxu0
    %v1799 = vadd.f32 %v1755, %v1798
    %1800 = vmatmul.f32.gmra.mxu0 %v1580
    %v1801 = vpop.f32.mrf.mxu0
    %v1802 = vadd.f32 %v1758, %v1801
    %1803 = vmatmul.f32.gmra.mxu0 %v1584
    %v1804 = vpop.f32.mrf.mxu0
    %v1805 = vadd.f32 %v1761, %v1804
    %1806 = vmatmul.f32.gmra.mxu0 %v1588
    %v1807 = vpop.f32.mrf.mxu0
    %v1808 = vadd.f32 %v1764, %v1807
    %1809 = vmatmul.f32.gmra.mxu0 %v1592
    %v1810 = vpop.f32.mrf.mxu0
    %v1811 = vadd.f32 %v1767, %v1810
    %1812 = vmatmul.f32.gmra.mxu0 %v1596
    %v1813 = vpop.f32.mrf.mxu0
    %v1814 = vadd.f32 %v1770, %v1813
    %1815 = vmatmul.f32.gmra.mxu0 %v1600
    %v1816 = vpop.f32.mrf.mxu0
    %v1817 = vadd.f32 %v1773, %v1816
    %1818 = vdwg.mxu0
    %1819 = vmatpush.msra.mxu0 %v1697
    %1820 = vmatpush.msra.mxu0 %v1695
    %1821 = vmatpush.msra.mxu0 %v1693
    %1822 = vmatpush.msra.mxu0 %v1691
    %1823 = vmatpush.msra.mxu0 %v1689
    %1824 = vmatpush.msra.mxu0 %v1687
    %1825 = vmatpush.msra.mxu0 %v1685
    %1826 = vmatpush.msra.mxu0 %v1683
    %1827 = vmatpush.msra.mxu0 %v1681
    %1828 = vmatpush.msra.mxu0 %v1679
    %1829 = vmatpush.msra.mxu0 %v1677
    %1830 = vmatpush.msra.mxu0 %v1675
    %1831 = vmatpush.msra.mxu0 %v1673
    %1832 = vmatpush.msra.mxu0 %v1671
    %1833 = vmatpush.msra.mxu0 %v1669
    %1834 = vmatpush.msra.mxu0 %v1667
    %1835 = vmatmul.f32.gmra.mxu0 %v1569
    %v1836 = vpop.f32.mrf.mxu0
    %v1837 = vadd.f32 %v1793, %v1836
    %1838 = vmatmul.f32.gmra.mxu0 %v1573
    %v1839 = vpop.f32.mrf.mxu0
    %v1840 = vadd.f32 %v1796, %v1839
    %1841 = vmatmul.f32.gmra.mxu0 %v1577
    %v1842 = vpop.f32.mrf.mxu0
    %v1843 = vadd.f32 %v1799, %v1842
    %1844 = vmatmul.f32.gmra.mxu0 %v1581
    %v1845 = vpop.f32.mrf.mxu0
    %v1846 = vadd.f32 %v1802, %v1845
    %1847 = vmatmul.f32.gmra.mxu0 %v1585
    %v1848 = vpop.f32.mrf.mxu0
    %v1849 = vadd.f32 %v1805, %v1848
    %1850 = vmatmul.f32.gmra.mxu0 %v1589
    %v1851 = vpop.f32.mrf.mxu0
    %v1852 = vadd.f32 %v1808, %v1851
    %1853 = vmatmul.f32.gmra.mxu0 %v1593
    %v1854 = vpop.f32.mrf.mxu0
    %v1855 = vadd.f32 %v1811, %v1854
    %1856 = vmatmul.f32.gmra.mxu0 %v1597
    %v1857 = vpop.f32.mrf.mxu0
    %v1858 = vadd.f32 %v1814, %v1857
    %1859 = vmatmul.f32.gmra.mxu0 %v1601
    %v1860 = vpop.f32.mrf.mxu0
    %v1861 = vadd.f32 %v1817, %v1860
    %1862 = vdwg.mxu0
    %1863 = vmatpush.msra.mxu0 %v1729
    %1864 = vmatpush.msra.mxu0 %v1727
    %1865 = vmatpush.msra.mxu0 %v1725
    %1866 = vmatpush.msra.mxu0 %v1723
    %1867 = vmatpush.msra.mxu0 %v1721
    %1868 = vmatpush.msra.mxu0 %v1719
    %1869 = vmatpush.msra.mxu0 %v1717
    %1870 = vmatpush.msra.mxu0 %v1715
    %1871 = vmatpush.msra.mxu0 %v1713
    %1872 = vmatpush.msra.mxu0 %v1711
    %1873 = vmatpush.msra.mxu0 %v1709
    %1874 = vmatpush.msra.mxu0 %v1707
    %1875 = vmatpush.msra.mxu0 %v1705
    %1876 = vmatpush.msra.mxu0 %v1703
    %1877 = vmatpush.msra.mxu0 %v1701
    %1878 = vmatpush.msra.mxu0 %v1699
    %1879 = vmatmul.f32.gmra.mxu0 %v1570
    %v1880 = vpop.f32.mrf.mxu0
    %v1881 = vadd.f32 %v1837, %v1880
    %1882 = vmatmul.f32.gmra.mxu0 %v1574
    %v1883 = vpop.f32.mrf.mxu0
    %v1884 = vadd.f32 %v1840, %v1883
    %1885 = vmatmul.f32.gmra.mxu0 %v1578
    %v1886 = vpop.f32.mrf.mxu0
    %v1887 = vadd.f32 %v1843, %v1886
    %1888 = vmatmul.f32.gmra.mxu0 %v1582
    %v1889 = vpop.f32.mrf.mxu0
    %v1890 = vadd.f32 %v1846, %v1889
    %1891 = vmatmul.f32.gmra.mxu0 %v1586
    %v1892 = vpop.f32.mrf.mxu0
    %v1893 = vadd.f32 %v1849, %v1892
    %1894 = vmatmul.f32.gmra.mxu0 %v1590
    %v1895 = vpop.f32.mrf.mxu0
    %v1896 = vadd.f32 %v1852, %v1895
    %1897 = vmatmul.f32.gmra.mxu0 %v1594
    %v1898 = vpop.f32.mrf.mxu0
    %v1899 = vadd.f32 %v1855, %v1898
    %1900 = vmatmul.f32.gmra.mxu0 %v1598
    %v1901 = vpop.f32.mrf.mxu0
    %v1902 = vadd.f32 %v1858, %v1901
    %1903 = vmatmul.f32.gmra.mxu0 %v1602
    %v1904 = vpop.f32.mrf.mxu0
    %v1905 = vadd.f32 %v1861, %v1904
    %1906 = vdwg.mxu0
    %1907 = vmatpush.msra.mxu0 %v1634
    %1908 = vmatpush.msra.mxu0 %v1632
    %1909 = vmatpush.msra.mxu0 %v1630
    %1910 = vmatpush.msra.mxu0 %v1628
    %1911 = vmatpush.msra.mxu0 %v1626
    %1912 = vmatpush.msra.mxu0 %v1624
    %1913 = vmatpush.msra.mxu0 %v1622
    %1914 = vmatpush.msra.mxu0 %v1620
    %1915 = vmatpush.msra.mxu0 %v1618
    %1916 = vmatpush.msra.mxu0 %v1616
    %1917 = vmatpush.msra.mxu0 %v1614
    %1918 = vmatpush.msra.mxu0 %v1612
    %1919 = vmatpush.msra.mxu0 %v1610
    %1920 = vmatpush.msra.mxu0 %v1608
    %1921 = vmatpush.msra.mxu0 %v1606
    %1922 = vmatpush.msra.mxu0 %v1604
    %1923 = vmatmul.f32.gmra.mxu0 %v1567
    %v1924 = vpop.f32.mrf.mxu0
    %v1925 = vadd.f32 0.0, %v1924
    %1926 = vmatmul.f32.gmra.mxu0 %v1571
    %v1927 = vpop.f32.mrf.mxu0
    %v1928 = vadd.f32 0.0, %v1927
    %1929 = vmatmul.f32.gmra.mxu0 %v1575
    %v1930 = vpop.f32.mrf.mxu0
    %v1931 = vadd.f32 0.0, %v1930
    %1932 = vmatmul.f32.gmra.mxu0 %v1579
    %v1933 = vpop.f32.mrf.mxu0
    %v1934 = vadd.f32 0.0, %v1933
    %1935 = vmatmul.f32.gmra.mxu0 %v1583
    %v1936 = vpop.f32.mrf.mxu0
    %v1937 = vadd.f32 0.0, %v1936
    %1938 = vmatmul.f32.gmra.mxu0 %v1587
    %v1939 = vpop.f32.mrf.mxu0
    %v1940 = vadd.f32 0.0, %v1939
    %1941 = vmatmul.f32.gmra.mxu0 %v1591
    %v1942 = vpop.f32.mrf.mxu0
    %v1943 = vadd.f32 0.0, %v1942
    %1944 = vmatmul.f32.gmra.mxu0 %v1595
    %v1945 = vpop.f32.mrf.mxu0
    %v1946 = vadd.f32 0.0, %v1945
    %1947 = vmatmul.f32.gmra.mxu0 %v1599
    %v1948 = vpop.f32.mrf.mxu0
    %v1949 = vadd.f32 0.0, %v1948
    %1950 = vdwg.mxu0
    %1951 = vmatpush.msra.mxu0 %v1666
    %1952 = vmatpush.msra.mxu0 %v1664
    %1953 = vmatpush.msra.mxu0 %v1662
    %1954 = vmatpush.msra.mxu0 %v1660
    %1955 = vmatpush.msra.mxu0 %v1658
    %1956 = vmatpush.msra.mxu0 %v1656
    %1957 = vmatpush.msra.mxu0 %v1654
    %1958 = vmatpush.msra.mxu0 %v1652
    %1959 = vmatpush.msra.mxu0 %v1650
    %1960 = vmatpush.msra.mxu0 %v1648
    %1961 = vmatpush.msra.mxu0 %v1646
    %1962 = vmatpush.msra.mxu0 %v1644
    %1963 = vmatpush.msra.mxu0 %v1642
    %1964 = vmatpush.msra.mxu0 %v1640
    %1965 = vmatpush.msra.mxu0 %v1638
    %1966 = vmatpush.msra.mxu0 %v1636
    %1967 = vmatmul.f32.gmra.mxu0 %v1568
    %v1968 = vpop.f32.mrf.mxu0
    %v1969 = vadd.f32 %v1925, %v1968
    %1970 = vmatmul.f32.gmra.mxu0 %v1572
    %v1971 = vpop.f32.mrf.mxu0
    %v1972 = vadd.f32 %v1928, %v1971
    %1973 = vmatmul.f32.gmra.mxu0 %v1576
    %v1974 = vpop.f32.mrf.mxu0
    %v1975 = vadd.f32 %v1931, %v1974
    %1976 = vmatmul.f32.gmra.mxu0 %v1580
    %v1977 = vpop.f32.mrf.mxu0
    %v1978 = vadd.f32 %v1934, %v1977
    %1979 = vmatmul.f32.gmra.mxu0 %v1584
    %v1980 = vpop.f32.mrf.mxu0
    %v1981 = vadd.f32 %v1937, %v1980
    %1982 = vmatmul.f32.gmra.mxu0 %v1588
    %v1983 = vpop.f32.mrf.mxu0
    %v1984 = vadd.f32 %v1940, %v1983
    %1985 = vmatmul.f32.gmra.mxu0 %v1592
    %v1986 = vpop.f32.mrf.mxu0
    %v1987 = vadd.f32 %v1943, %v1986
    %1988 = vmatmul.f32.gmra.mxu0 %v1596
    %v1989 = vpop.f32.mrf.mxu0
    %v1990 = vadd.f32 %v1946, %v1989
    %1991 = vmatmul.f32.gmra.mxu0 %v1600
    %v1992 = vpop.f32.mrf.mxu0
    %v1993 = vadd.f32 %v1949, %v1992
    %1994 = vdwg.mxu0
    %1995 = vmatpush.msra.mxu0 %v1698
    %1996 = vmatpush.msra.mxu0 %v1696
    %1997 = vmatpush.msra.mxu0 %v1694
    %1998 = vmatpush.msra.mxu0 %v1692
    %1999 = vmatpush.msra.mxu0 %v1690
    %2000 = vmatpush.msra.mxu0 %v1688
    %2001 = vmatpush.msra.mxu0 %v1686
    %2002 = vmatpush.msra.mxu0 %v1684
    %2003 = vmatpush.msra.mxu0 %v1682
    %2004 = vmatpush.msra.mxu0 %v1680
    %2005 = vmatpush.msra.mxu0 %v1678
    %2006 = vmatpush.msra.mxu0 %v1676
    %2007 = vmatpush.msra.mxu0 %v1674
    %2008 = vmatpush.msra.mxu0 %v1672
    %2009 = vmatpush.msra.mxu0 %v1670
    %2010 = vmatpush.msra.mxu0 %v1668
    %2011 = vmatmul.f32.gmra.mxu0 %v1569
    %v2012 = vpop.f32.mrf.mxu0
    %v2013 = vadd.f32 %v1969, %v2012
    %2014 = vmatmul.f32.gmra.mxu0 %v1573
    %v2015 = vpop.f32.mrf.mxu0
    %v2016 = vadd.f32 %v1972, %v2015
    %2017 = vmatmul.f32.gmra.mxu0 %v1577
    %v2018 = vpop.f32.mrf.mxu0
    %v2019 = vadd.f32 %v1975, %v2018
    %2020 = vmatmul.f32.gmra.mxu0 %v1581
    %v2021 = vpop.f32.mrf.mxu0
    %v2022 = vadd.f32 %v1978, %v2021
    %2023 = vmatmul.f32.gmra.mxu0 %v1585
    %v2024 = vpop.f32.mrf.mxu0
    %v2025 = vadd.f32 %v1981, %v2024
    %2026 = vmatmul.f32.gmra.mxu0 %v1589
    %v2027 = vpop.f32.mrf.mxu0
    %v2028 = vadd.f32 %v1984, %v2027
    %2029 = vmatmul.f32.gmra.mxu0 %v1593
    %v2030 = vpop.f32.mrf.mxu0
    %v2031 = vadd.f32 %v1987, %v2030
    %2032 = vmatmul.f32.gmra.mxu0 %v1597
    %v2033 = vpop.f32.mrf.mxu0
    %v2034 = vadd.f32 %v1990, %v2033
    %2035 = vmatmul.f32.gmra.mxu0 %v1601
    %v2036 = vpop.f32.mrf.mxu0
    %v2037 = vadd.f32 %v1993, %v2036
    %2038 = vdwg.mxu0
    %2039 = vmatpush.msra.mxu0 %v1730
    %2040 = vmatpush.msra.mxu0 %v1728
    %2041 = vmatpush.msra.mxu0 %v1726
    %2042 = vmatpush.msra.mxu0 %v1724
    %2043 = vmatpush.msra.mxu0 %v1722
    %2044 = vmatpush.msra.mxu0 %v1720
    %2045 = vmatpush.msra.mxu0 %v1718
    %2046 = vmatpush.msra.mxu0 %v1716
    %2047 = vmatpush.msra.mxu0 %v1714
    %2048 = vmatpush.msra.mxu0 %v1712
    %2049 = vmatpush.msra.mxu0 %v1710
    %2050 = vmatpush.msra.mxu0 %v1708
    %2051 = vmatpush.msra.mxu0 %v1706
    %2052 = vmatpush.msra.mxu0 %v1704
    %2053 = vmatpush.msra.mxu0 %v1702
    %2054 = vmatpush.msra.mxu0 %v1700
    %2055 = vmatmul.f32.gmra.mxu0 %v1570
    %v2056 = vpop.f32.mrf.mxu0
    %v2057 = vadd.f32 %v2013, %v2056
    %2058 = vmatmul.f32.gmra.mxu0 %v1574
    %v2059 = vpop.f32.mrf.mxu0
    %v2060 = vadd.f32 %v2016, %v2059
    %2061 = vmatmul.f32.gmra.mxu0 %v1578
    %v2062 = vpop.f32.mrf.mxu0
    %v2063 = vadd.f32 %v2019, %v2062
    %2064 = vmatmul.f32.gmra.mxu0 %v1582
    %v2065 = vpop.f32.mrf.mxu0
    %v2066 = vadd.f32 %v2022, %v2065
    %2067 = vmatmul.f32.gmra.mxu0 %v1586
    %v2068 = vpop.f32.mrf.mxu0
    %v2069 = vadd.f32 %v2025, %v2068
    %2070 = vmatmul.f32.gmra.mxu0 %v1590
    %v2071 = vpop.f32.mrf.mxu0
    %v2072 = vadd.f32 %v2028, %v2071
    %2073 = vmatmul.f32.gmra.mxu0 %v1594
    %v2074 = vpop.f32.mrf.mxu0
    %v2075 = vadd.f32 %v2031, %v2074
    %2076 = vmatmul.f32.gmra.mxu0 %v1598
    %v2077 = vpop.f32.mrf.mxu0
    %v2078 = vadd.f32 %v2034, %v2077
    %2079 = vmatmul.f32.gmra.mxu0 %v1602
    %v2080 = vpop.f32.mrf.mxu0
    %v2081 = vadd.f32 %v2037, %v2080
    %2082 = vdwg.mxu0
    %v2083 = vld [vmem:[%s10] sm:$0x3]
    %v2085 = vperm.slane %v2083, 0
    %v2086 = vperm.slane %v2083, 1
    %v2090 = vsel %vm144, %v1905, 0
    %v2093 = vsel %vm144, %v2081, 0
    %2095 = vmatpush.msra.mxu0 0.0
    %2096 = vmatpush.msra.mxu0 0.0
    %2097 = vmatpush.msra.mxu0 0.0
    %2098 = vmatpush.msra.mxu0 0.0
    %2099 = vmatpush.msra.mxu0 0.0
    %2100 = vmatpush.msra.mxu0 0.0
    %2101 = vmatpush.msra.mxu0 0.0
    %2102 = vmatpush.msra.mxu0 %v2090
    %2103 = vmatpush.msra.mxu0 %v1902
    %2104 = vmatpush.msra.mxu0 %v1899
    %2105 = vmatpush.msra.mxu0 %v1896
    %2106 = vmatpush.msra.mxu0 %v1893
    %2107 = vmatpush.msra.mxu0 %v1890
    %2108 = vmatpush.msra.mxu0 %v1887
    %2109 = vmatpush.msra.mxu0 %v1884
    %2110 = vmatpush.msra.mxu0 %v1881
    %2111 = vmatmul.f32.gmra.mxu0 %v118
    %v2112 = vpop.f32.mrf.mxu0
    %v2113 = vadd.f32 %v2085, %v2112
    %2114 = vmatmul.f32.gmra.mxu0 %v121
    %v2115 = vpop.f32.mrf.mxu0
    %v2116 = vadd.f32 %v2085, %v2115
    %2117 = vmatmul.f32.gmra.mxu0 %v124
    %v2118 = vpop.f32.mrf.mxu0
    %v2119 = vadd.f32 %v2085, %v2118
    %2120 = vmatmul.f32.gmra.mxu0 %v127
    %v2121 = vpop.f32.mrf.mxu0
    %v2122 = vadd.f32 %v2085, %v2121
    %2123 = vmatmul.f32.gmra.mxu0 %v130
    %v2124 = vpop.f32.mrf.mxu0
    %v2125 = vadd.f32 %v2085, %v2124
    %2126 = vmatmul.f32.gmra.mxu0 %v133
    %v2127 = vpop.f32.mrf.mxu0
    %v2128 = vadd.f32 %v2085, %v2127
    %2129 = vmatmul.f32.gmra.mxu0 %v136
    %v2130 = vpop.f32.mrf.mxu0
    %v2131 = vadd.f32 %v2085, %v2130
    %2132 = vmatmul.f32.gmra.mxu0 %v139
    %v2133 = vpop.f32.mrf.mxu0
    %v2134 = vadd.f32 %v2085, %v2133
    %2135 = vmatmul.f32.gmra.mxu0 %v142
    %v2136 = vpop.f32.mrf.mxu0
    %v2137 = vadd.f32 %v2085, %v2136
    %2138 = vdwg.mxu0
    %2139 = vmatpush.msra.mxu0 0.0
    %2140 = vmatpush.msra.mxu0 0.0
    %2141 = vmatpush.msra.mxu0 0.0
    %2142 = vmatpush.msra.mxu0 0.0
    %2143 = vmatpush.msra.mxu0 0.0
    %2144 = vmatpush.msra.mxu0 0.0
    %2145 = vmatpush.msra.mxu0 0.0
    %2146 = vmatpush.msra.mxu0 %v2093
    %2147 = vmatpush.msra.mxu0 %v2078
    %2148 = vmatpush.msra.mxu0 %v2075
    %2149 = vmatpush.msra.mxu0 %v2072
    %2150 = vmatpush.msra.mxu0 %v2069
    %2151 = vmatpush.msra.mxu0 %v2066
    %2152 = vmatpush.msra.mxu0 %v2063
    %2153 = vmatpush.msra.mxu0 %v2060
    %2154 = vmatpush.msra.mxu0 %v2057
    %2155 = vmatmul.f32.gmra.mxu0 %v118
    %v2156 = vpop.f32.mrf.mxu0
    %v2157 = vadd.f32 %v2086, %v2156
    %2158 = vmatmul.f32.gmra.mxu0 %v121
    %v2159 = vpop.f32.mrf.mxu0
    %v2160 = vadd.f32 %v2086, %v2159
    %2161 = vmatmul.f32.gmra.mxu0 %v124
    %v2162 = vpop.f32.mrf.mxu0
    %v2163 = vadd.f32 %v2086, %v2162
    %2164 = vmatmul.f32.gmra.mxu0 %v127
    %v2165 = vpop.f32.mrf.mxu0
    %v2166 = vadd.f32 %v2086, %v2165
    %2167 = vmatmul.f32.gmra.mxu0 %v130
    %v2168 = vpop.f32.mrf.mxu0
    %v2169 = vadd.f32 %v2086, %v2168
    %2170 = vmatmul.f32.gmra.mxu0 %v133
    %v2171 = vpop.f32.mrf.mxu0
    %v2172 = vadd.f32 %v2086, %v2171
    %2173 = vmatmul.f32.gmra.mxu0 %v136
    %v2174 = vpop.f32.mrf.mxu0
    %v2175 = vadd.f32 %v2086, %v2174
    %2176 = vmatmul.f32.gmra.mxu0 %v139
    %v2177 = vpop.f32.mrf.mxu0
    %v2178 = vadd.f32 %v2086, %v2177
    %2179 = vmatmul.f32.gmra.mxu0 %v142
    %v2180 = vpop.f32.mrf.mxu0
    %v2181 = vadd.f32 %v2086, %v2180
    %2182 = vdwg.mxu0
    %v2183 = vmax.f32 %v2113, 0.0
    %v2184 = vmax.f32 %v2157, 0.0
    %v2185 = vmax.f32 %v2116, 0.0
    %v2186 = vmax.f32 %v2160, 0.0
    %v2187 = vmax.f32 %v2119, 0.0
    %v2188 = vmax.f32 %v2163, 0.0
    %v2189 = vmax.f32 %v2122, 0.0
    %v2190 = vmax.f32 %v2166, 0.0
    %v2191 = vmax.f32 %v2125, 0.0
    %v2192 = vmax.f32 %v2169, 0.0
    %v2193 = vmax.f32 %v2128, 0.0
    %v2194 = vmax.f32 %v2172, 0.0
    %v2195 = vmax.f32 %v2131, 0.0
    %v2196 = vmax.f32 %v2175, 0.0
    %v2197 = vmax.f32 %v2134, 0.0
    %v2198 = vmax.f32 %v2178, 0.0
    %v2199 = vmax.f32 %v2137, 0.0
    %v2200 = vmax.f32 %v2181, 0.0
    %v2201 = vld [vmem:[%s11] sm:$0xff]
    %v2202 = vld [vmem:[%s11 + $0x8] sm:$0xff]
    %v2203 = vld [vmem:[%s11 + $0x10] sm:$0xff]
    %v2204 = vld [vmem:[%s11 + $0x18] sm:$0xff]
    %v2205 = vld [vmem:[%s11 + $0x20] sm:$0xff]
    %v2206 = vld [vmem:[%s11 + $0x28] sm:$0xff]
    %v2207 = vld [vmem:[%s11 + $0x30] sm:$0xff]
    %v2208 = vld [vmem:[%s11 + $0x38] sm:$0xff]
    %v2209 = vld [vmem:[%s11 + $0x40] sm:$0xff]
    %v2210 = vld [vmem:[%s11 + $0x48] sm:$0xff]
    %v2211 = vld [vmem:[%s11 + $0x50] sm:$0xff]
    %v2212 = vld [vmem:[%s11 + $0x58] sm:$0xff]
    %v2213 = vld [vmem:[%s11 + $0x60] sm:$0xff]
    %v2214 = vld [vmem:[%s11 + $0x68] sm:$0xff]
    %v2215 = vld [vmem:[%s11 + $0x70] sm:$0xff]
    %v2216 = vld [vmem:[%s11 + $0x78] sm:$0xff]
    %v2217 = vld [vmem:[%s11 + $0x80] sm:$0xff]
    %v2218 = vld [vmem:[%s11 + $0x88] sm:$0xff]
    %v2219 = vld [vmem:[%s11 + $0x90] sm:$0xff]
    %v2220 = vld [vmem:[%s11 + $0x98] sm:$0xff]
    %v2221 = vld [vmem:[%s11 + $0xa0] sm:$0xff]
    %v2222 = vld [vmem:[%s11 + $0xa8] sm:$0xff]
    %v2223 = vld [vmem:[%s11 + $0xb0] sm:$0xff]
    %v2224 = vld [vmem:[%s11 + $0xb8] sm:$0xff]
    %v2225 = vld [vmem:[%s11 + $0xc0] sm:$0xff]
    %v2226 = vld [vmem:[%s11 + $0xc8] sm:$0xff]
    %v2227 = vld [vmem:[%s11 + $0xd0] sm:$0xff]
    %v2228 = vld [vmem:[%s11 + $0xd8] sm:$0xff]
    %v2229 = vld [vmem:[%s11 + $0xe0] sm:$0xff]
    %v2230 = vld [vmem:[%s11 + $0xe8] sm:$0xff]
    %v2231 = vld [vmem:[%s11 + $0xf0] sm:$0xff]
    %v2232 = vld [vmem:[%s11 + $0xf8] sm:$0xff]
    %2233 = vmatpush.msra.mxu0 %v2216
    %2234 = vmatpush.msra.mxu0 %v2215
    %2235 = vmatpush.msra.mxu0 %v2214
    %2236 = vmatpush.msra.mxu0 %v2213
    %2237 = vmatpush.msra.mxu0 %v2212
    %2238 = vmatpush.msra.mxu0 %v2211
    %2239 = vmatpush.msra.mxu0 %v2210
    %2240 = vmatpush.msra.mxu0 %v2209
    %2241 = vmatpush.msra.mxu0 %v2208
    %2242 = vmatpush.msra.mxu0 %v2207
    %2243 = vmatpush.msra.mxu0 %v2206
    %2244 = vmatpush.msra.mxu0 %v2205
    %2245 = vmatpush.msra.mxu0 %v2204
    %2246 = vmatpush.msra.mxu0 %v2203
    %2247 = vmatpush.msra.mxu0 %v2202
    %2248 = vmatpush.msra.mxu0 %v2201
    %2249 = vmatmul.f32.gmra.mxu0 %v2183
    %v2250 = vpop.f32.mrf.mxu0
    %v2251 = vadd.f32 0.0, %v2250
    %2252 = vmatmul.f32.gmra.mxu0 %v2185
    %v2253 = vpop.f32.mrf.mxu0
    %v2254 = vadd.f32 0.0, %v2253
    %2255 = vmatmul.f32.gmra.mxu0 %v2187
    %v2256 = vpop.f32.mrf.mxu0
    %v2257 = vadd.f32 0.0, %v2256
    %2258 = vmatmul.f32.gmra.mxu0 %v2189
    %v2259 = vpop.f32.mrf.mxu0
    %v2260 = vadd.f32 0.0, %v2259
    %2261 = vmatmul.f32.gmra.mxu0 %v2191
    %v2262 = vpop.f32.mrf.mxu0
    %v2263 = vadd.f32 0.0, %v2262
    %2264 = vmatmul.f32.gmra.mxu0 %v2193
    %v2265 = vpop.f32.mrf.mxu0
    %v2266 = vadd.f32 0.0, %v2265
    %2267 = vmatmul.f32.gmra.mxu0 %v2195
    %v2268 = vpop.f32.mrf.mxu0
    %v2269 = vadd.f32 0.0, %v2268
    %2270 = vmatmul.f32.gmra.mxu0 %v2197
    %v2271 = vpop.f32.mrf.mxu0
    %v2272 = vadd.f32 0.0, %v2271
    %2273 = vmatmul.f32.gmra.mxu0 %v2199
    %v2274 = vpop.f32.mrf.mxu0
    %v2275 = vadd.f32 0.0, %v2274
    %2276 = vdwg.mxu0
    %2277 = vmatpush.msra.mxu0 %v2232
    %2278 = vmatpush.msra.mxu0 %v2231
    %2279 = vmatpush.msra.mxu0 %v2230
    %2280 = vmatpush.msra.mxu0 %v2229
    %2281 = vmatpush.msra.mxu0 %v2228
    %2282 = vmatpush.msra.mxu0 %v2227
    %2283 = vmatpush.msra.mxu0 %v2226
    %2284 = vmatpush.msra.mxu0 %v2225
    %2285 = vmatpush.msra.mxu0 %v2224
    %2286 = vmatpush.msra.mxu0 %v2223
    %2287 = vmatpush.msra.mxu0 %v2222
    %2288 = vmatpush.msra.mxu0 %v2221
    %2289 = vmatpush.msra.mxu0 %v2220
    %2290 = vmatpush.msra.mxu0 %v2219
    %2291 = vmatpush.msra.mxu0 %v2218
    %2292 = vmatpush.msra.mxu0 %v2217
    %2293 = vmatmul.f32.gmra.mxu0 %v2184
    %v2294 = vpop.f32.mrf.mxu0
    %v2295 = vadd.f32 %v2251, %v2294
    %2296 = vmatmul.f32.gmra.mxu0 %v2186
    %v2297 = vpop.f32.mrf.mxu0
    %v2298 = vadd.f32 %v2254, %v2297
    %2299 = vmatmul.f32.gmra.mxu0 %v2188
    %v2300 = vpop.f32.mrf.mxu0
    %v2301 = vadd.f32 %v2257, %v2300
    %2302 = vmatmul.f32.gmra.mxu0 %v2190
    %v2303 = vpop.f32.mrf.mxu0
    %v2304 = vadd.f32 %v2260, %v2303
    %2305 = vmatmul.f32.gmra.mxu0 %v2192
    %v2306 = vpop.f32.mrf.mxu0
    %v2307 = vadd.f32 %v2263, %v2306
    %2308 = vmatmul.f32.gmra.mxu0 %v2194
    %v2309 = vpop.f32.mrf.mxu0
    %v2310 = vadd.f32 %v2266, %v2309
    %2311 = vmatmul.f32.gmra.mxu0 %v2196
    %v2312 = vpop.f32.mrf.mxu0
    %v2313 = vadd.f32 %v2269, %v2312
    %2314 = vmatmul.f32.gmra.mxu0 %v2198
    %v2315 = vpop.f32.mrf.mxu0
    %v2316 = vadd.f32 %v2272, %v2315
    %2317 = vmatmul.f32.gmra.mxu0 %v2200
    %v2318 = vpop.f32.mrf.mxu0
    %v2319 = vadd.f32 %v2275, %v2318
    %2320 = vdwg.mxu0
    %v2321 = vld [vmem:[%s12] sm:$0x1]
    %v2323 = vperm.slane %v2321, 0
    %v2326 = vsel %vm144, %v2319, 0
    %2328 = vmatpush.msra.mxu0 0.0
    %2329 = vmatpush.msra.mxu0 0.0
    %2330 = vmatpush.msra.mxu0 0.0
    %2331 = vmatpush.msra.mxu0 0.0
    %2332 = vmatpush.msra.mxu0 0.0
    %2333 = vmatpush.msra.mxu0 0.0
    %2334 = vmatpush.msra.mxu0 0.0
    %2335 = vmatpush.msra.mxu0 %v2326
    %2336 = vmatpush.msra.mxu0 %v2316
    %2337 = vmatpush.msra.mxu0 %v2313
    %2338 = vmatpush.msra.mxu0 %v2310
    %2339 = vmatpush.msra.mxu0 %v2307
    %2340 = vmatpush.msra.mxu0 %v2304
    %2341 = vmatpush.msra.mxu0 %v2301
    %2342 = vmatpush.msra.mxu0 %v2298
    %2343 = vmatpush.msra.mxu0 %v2295
    %2344 = vmatmul.f32.gmra.mxu0 %v118
    %v2345 = vpop.f32.mrf.mxu0
    %v2346 = vadd.f32 %v2323, %v2345
    %2347 = vmatmul.f32.gmra.mxu0 %v121
    %v2348 = vpop.f32.mrf.mxu0
    %v2349 = vadd.f32 %v2323, %v2348
    %2350 = vmatmul.f32.gmra.mxu0 %v124
    %v2351 = vpop.f32.mrf.mxu0
    %v2352 = vadd.f32 %v2323, %v2351
    %2353 = vmatmul.f32.gmra.mxu0 %v127
    %v2354 = vpop.f32.mrf.mxu0
    %v2355 = vadd.f32 %v2323, %v2354
    %2356 = vmatmul.f32.gmra.mxu0 %v130
    %v2357 = vpop.f32.mrf.mxu0
    %v2358 = vadd.f32 %v2323, %v2357
    %2359 = vmatmul.f32.gmra.mxu0 %v133
    %v2360 = vpop.f32.mrf.mxu0
    %v2361 = vadd.f32 %v2323, %v2360
    %2362 = vmatmul.f32.gmra.mxu0 %v136
    %v2363 = vpop.f32.mrf.mxu0
    %v2364 = vadd.f32 %v2323, %v2363
    %2365 = vmatmul.f32.gmra.mxu0 %v139
    %v2366 = vpop.f32.mrf.mxu0
    %v2367 = vadd.f32 %v2323, %v2366
    %2368 = vmatmul.f32.gmra.mxu0 %v142
    %v2369 = vpop.f32.mrf.mxu0
    %v2370 = vadd.f32 %v2323, %v2369
    %2371 = vdwg.mxu0
    %v2372 = vmax.f32 %v2346, 0.0
    %v2373 = vmax.f32 %v2349, 0.0
    %v2374 = vmax.f32 %v2352, 0.0
    %v2375 = vmax.f32 %v2355, 0.0
    %v2376 = vmax.f32 %v2358, 0.0
    %v2377 = vmax.f32 %v2361, 0.0
    %v2378 = vmax.f32 %v2364, 0.0
    %v2379 = vmax.f32 %v2367, 0.0
    %v2380 = vmax.f32 %v2370, 0.0
    %v2381 = vld [vmem:[%s13] sm:$0xff]
    %v2382 = vld [vmem:[%s13 + $0x8] sm:$0xff]
    %v2383 = vld [vmem:[%s13 + $0x10] sm:$0xff]
    %v2384 = vld [vmem:[%s13 + $0x18] sm:$0xff]
    %v2385 = vld [vmem:[%s13 + $0x20] sm:$0xff]
    %v2386 = vld [vmem:[%s13 + $0x28] sm:$0xff]
    %v2387 = vld [vmem:[%s13 + $0x30] sm:$0xff]
    %v2388 = vld [vmem:[%s13 + $0x38] sm:$0xff]
    %v2389 = vld [vmem:[%s13 + $0x40] sm:$0xff]
    %v2390 = vld [vmem:[%s13 + $0x48] sm:$0xff]
    %v2391 = vld [vmem:[%s13 + $0x50] sm:$0xff]
    %v2392 = vld [vmem:[%s13 + $0x58] sm:$0xff]
    %v2393 = vld [vmem:[%s13 + $0x60] sm:$0xff]
    %v2394 = vld [vmem:[%s13 + $0x68] sm:$0xff]
    %v2395 = vld [vmem:[%s13 + $0x70] sm:$0xff]
    %v2396 = vld [vmem:[%s13 + $0x78] sm:$0xff]
    %2397 = vmatpush.msra.mxu0 %v2396
    %2398 = vmatpush.msra.mxu0 %v2395
    %2399 = vmatpush.msra.mxu0 %v2394
    %2400 = vmatpush.msra.mxu0 %v2393
    %2401 = vmatpush.msra.mxu0 %v2392
    %2402 = vmatpush.msra.mxu0 %v2391
    %2403 = vmatpush.msra.mxu0 %v2390
    %2404 = vmatpush.msra.mxu0 %v2389
    %2405 = vmatpush.msra.mxu0 %v2388
    %2406 = vmatpush.msra.mxu0 %v2387
    %2407 = vmatpush.msra.mxu0 %v2386
    %2408 = vmatpush.msra.mxu0 %v2385
    %2409 = vmatpush.msra.mxu0 %v2384
    %2410 = vmatpush.msra.mxu0 %v2383
    %2411 = vmatpush.msra.mxu0 %v2382
    %2412 = vmatpush.msra.mxu0 %v2381
    %2413 = vmatmul.f32.gmra.mxu0 %v2372
    %v2414 = vpop.f32.mrf.mxu0
    %v2415 = vadd.f32 0.0, %v2414
    %2416 = vmatmul.f32.gmra.mxu0 %v2373
    %v2417 = vpop.f32.mrf.mxu0
    %v2418 = vadd.f32 0.0, %v2417
    %2419 = vmatmul.f32.gmra.mxu0 %v2374
    %v2420 = vpop.f32.mrf.mxu0
    %v2421 = vadd.f32 0.0, %v2420
    %2422 = vmatmul.f32.gmra.mxu0 %v2375
    %v2423 = vpop.f32.mrf.mxu0
    %v2424 = vadd.f32 0.0, %v2423
    %2425 = vmatmul.f32.gmra.mxu0 %v2376
    %v2426 = vpop.f32.mrf.mxu0
    %v2427 = vadd.f32 0.0, %v2426
    %2428 = vmatmul.f32.gmra.mxu0 %v2377
    %v2429 = vpop.f32.mrf.mxu0
    %v2430 = vadd.f32 0.0, %v2429
    %2431 = vmatmul.f32.gmra.mxu0 %v2378
    %v2432 = vpop.f32.mrf.mxu0
    %v2433 = vadd.f32 0.0, %v2432
    %2434 = vmatmul.f32.gmra.mxu0 %v2379
    %v2435 = vpop.f32.mrf.mxu0
    %v2436 = vadd.f32 0.0, %v2435
    %2437 = vmatmul.f32.gmra.mxu0 %v2380
    %v2438 = vpop.f32.mrf.mxu0
    %v2439 = vadd.f32 0.0, %v2438
    %2440 = vdwg.mxu0
    %v2441 = vld [vmem:[%s14] sm:$0x1]
    %v2443 = vperm.slane %v2441, 0
    %v2446 = vsel %vm144, %v2439, 0
    %2448 = vmatpush.msra.mxu0 0.0
    %2449 = vmatpush.msra.mxu0 0.0
    %2450 = vmatpush.msra.mxu0 0.0
    %2451 = vmatpush.msra.mxu0 0.0
    %2452 = vmatpush.msra.mxu0 0.0
    %2453 = vmatpush.msra.mxu0 0.0
    %2454 = vmatpush.msra.mxu0 0.0
    %2455 = vmatpush.msra.mxu0 %v2446
    %2456 = vmatpush.msra.mxu0 %v2436
    %2457 = vmatpush.msra.mxu0 %v2433
    %2458 = vmatpush.msra.mxu0 %v2430
    %2459 = vmatpush.msra.mxu0 %v2427
    %2460 = vmatpush.msra.mxu0 %v2424
    %2461 = vmatpush.msra.mxu0 %v2421
    %2462 = vmatpush.msra.mxu0 %v2418
    %2463 = vmatpush.msra.mxu0 %v2415
    %2464 = vmatmul.f32.gmra.mxu0 %v118
    %v2465 = vpop.f32.mrf.mxu0
    %v2466 = vadd.f32 %v2443, %v2465
    %2467 = vmatmul.f32.gmra.mxu0 %v121
    %v2468 = vpop.f32.mrf.mxu0
    %v2469 = vadd.f32 %v2443, %v2468
    %2470 = vmatmul.f32.gmra.mxu0 %v124
    %v2471 = vpop.f32.mrf.mxu0
    %v2472 = vadd.f32 %v2443, %v2471
    %2473 = vmatmul.f32.gmra.mxu0 %v127
    %v2474 = vpop.f32.mrf.mxu0
    %v2475 = vadd.f32 %v2443, %v2474
    %2476 = vmatmul.f32.gmra.mxu0 %v130
    %v2477 = vpop.f32.mrf.mxu0
    %v2478 = vadd.f32 %v2443, %v2477
    %2479 = vmatmul.f32.gmra.mxu0 %v133
    %v2480 = vpop.f32.mrf.mxu0
    %v2481 = vadd.f32 %v2443, %v2480
    %2482 = vmatmul.f32.gmra.mxu0 %v136
    %v2483 = vpop.f32.mrf.mxu0
    %v2484 = vadd.f32 %v2443, %v2483
    %2485 = vmatmul.f32.gmra.mxu0 %v139
    %v2486 = vpop.f32.mrf.mxu0
    %v2487 = vadd.f32 %v2443, %v2486
    %2488 = vmatmul.f32.gmra.mxu0 %v142
    %v2489 = vpop.f32.mrf.mxu0
    %v2490 = vadd.f32 %v2443, %v2489
    %2491 = vdwg.mxu0
    %v2492 = vxor.u32 %v2466, 2147483648
    %v2493 = vxor.u32 %v2469, 2147483648
    %v2494 = vxor.u32 %v2472, 2147483648
    %v2495 = vxor.u32 %v2475, 2147483648
    %v2496 = vxor.u32 %v2478, 2147483648
    %v2497 = vxor.u32 %v2481, 2147483648
    %v2498 = vxor.u32 %v2484, 2147483648
    %v2499 = vxor.u32 %v2487, 2147483648
    %v2500 = vxor.u32 %v2490, 2147483648
    %v2501 = vmul.f32 %v2492, 1.442695
    %v2502 = vpow.pop %v2501
    %v2503 = vmul.f32 %v2493, 1.442695
    %v2504 = vpow.pop %v2503
    %v2505 = vmul.f32 %v2494, 1.442695
    %v2506 = vpow.pop %v2505
    %v2507 = vmul.f32 %v2495, 1.442695
    %v2508 = vpow.pop %v2507
    %v2509 = vmul.f32 %v2496, 1.442695
    %v2510 = vpow.pop %v2509
    %v2511 = vmul.f32 %v2497, 1.442695
    %v2512 = vpow.pop %v2511
    %v2513 = vmul.f32 %v2498, 1.442695
    %v2514 = vpow.pop %v2513
    %v2515 = vmul.f32 %v2499, 1.442695
    %v2516 = vpow.pop %v2515
    %v2517 = vmul.f32 %v2500, 1.442695
    %v2518 = vpow.pop %v2517
    %v2519 = vadd.f32 %v2502, 1.0
    %v2520 = vadd.f32 %v2504, 1.0
    %v2521 = vadd.f32 %v2506, 1.0
    %v2522 = vadd.f32 %v2508, 1.0
    %v2523 = vadd.f32 %v2510, 1.0
    %v2524 = vadd.f32 %v2512, 1.0
    %v2525 = vadd.f32 %v2514, 1.0
    %v2526 = vadd.f32 %v2516, 1.0
    %v2527 = vadd.f32 %v2518, 1.0
    %v2528 = vrcp.pop %v2519
    %v2529 = vmul.f32 %v2519, %v2528
    %v2530 = vsub.f32 1.0, %v2529
    %v2531 = vmul.f32 %v2528, %v2530
    %v2532 = vadd.f32 %v2528, %v2531
    %vm2533 = vweird.f32 %v2519
    %vm2534 = vweird.f32 %v2528
    %vm2535 = vmor %vm2533, %vm2534
    %v2536 = vsel %vm2535, %v2528, %v2532
    %v2537 = vand.u32 2147483647, %v2519
    %vm2538 = vcmp.eq.f32.partialorder %v2537, 8.507059e+37
    %v2539 = vand.u32 %v2519, 2147483648
    %v2540 = vor.u32 1.1754944e-38, %v2539
    %v2541 = vsel %vm2538, %v2540, %v2536
    %v2542 = vmul.f32 1.0, %v2541
    %v2543 = vrcp.pop %v2520
    %v2544 = vmul.f32 %v2520, %v2543
    %v2545 = vsub.f32 1.0, %v2544
    %v2546 = vmul.f32 %v2543, %v2545
    %v2547 = vadd.f32 %v2543, %v2546
    %vm2548 = vweird.f32 %v2520
    %vm2549 = vweird.f32 %v2543
    %vm2550 = vmor %vm2548, %vm2549
    %v2551 = vsel %vm2550, %v2543, %v2547
    %v2552 = vand.u32 2147483647, %v2520
    %vm2553 = vcmp.eq.f32.partialorder %v2552, 8.507059e+37
    %v2554 = vand.u32 %v2520, 2147483648
    %v2555 = vor.u32 1.1754944e-38, %v2554
    %v2556 = vsel %vm2553, %v2555, %v2551
    %v2557 = vmul.f32 1.0, %v2556
    %v2558 = vrcp.pop %v2521
    %v2559 = vmul.f32 %v2521, %v2558
    %v2560 = vsub.f32 1.0, %v2559
    %v2561 = vmul.f32 %v2558, %v2560
    %v2562 = vadd.f32 %v2558, %v2561
    %vm2563 = vweird.f32 %v2521
    %vm2564 = vweird.f32 %v2558
    %vm2565 = vmor %vm2563, %vm2564
    %v2566 = vsel %vm2565, %v2558, %v2562
    %v2567 = vand.u32 2147483647, %v2521
    %vm2568 = vcmp.eq.f32.partialorder %v2567, 8.507059e+37
    %v2569 = vand.u32 %v2521, 2147483648
    %v2570 = vor.u32 1.1754944e-38, %v2569
    %v2571 = vsel %vm2568, %v2570, %v2566
    %v2572 = vmul.f32 1.0, %v2571
    %v2573 = vrcp.pop %v2522
    %v2574 = vmul.f32 %v2522, %v2573
    %v2575 = vsub.f32 1.0, %v2574
    %v2576 = vmul.f32 %v2573, %v2575
    %v2577 = vadd.f32 %v2573, %v2576
    %vm2578 = vweird.f32 %v2522
    %vm2579 = vweird.f32 %v2573
    %vm2580 = vmor %vm2578, %vm2579
    %v2581 = vsel %vm2580, %v2573, %v2577
    %v2582 = vand.u32 2147483647, %v2522
    %vm2583 = vcmp.eq.f32.partialorder %v2582, 8.507059e+37
    %v2584 = vand.u32 %v2522, 2147483648
    %v2585 = vor.u32 1.1754944e-38, %v2584
    %v2586 = vsel %vm2583, %v2585, %v2581
    %v2587 = vmul.f32 1.0, %v2586
    %v2588 = vrcp.pop %v2523
    %v2589 = vmul.f32 %v2523, %v2588
    %v2590 = vsub.f32 1.0, %v2589
    %v2591 = vmul.f32 %v2588, %v2590
    %v2592 = vadd.f32 %v2588, %v2591
    %vm2593 = vweird.f32 %v2523
    %vm2594 = vweird.f32 %v2588
    %vm2595 = vmor %vm2593, %vm2594
    %v2596 = vsel %vm2595, %v2588, %v2592
    %v2597 = vand.u32 2147483647, %v2523
    %vm2598 = vcmp.eq.f32.partialorder %v2597, 8.507059e+37
    %v2599 = vand.u32 %v2523, 2147483648
    %v2600 = vor.u32 1.1754944e-38, %v2599
    %v2601 = vsel %vm2598, %v2600, %v2596
    %v2602 = vmul.f32 1.0, %v2601
    %v2603 = vrcp.pop %v2524
    %v2604 = vmul.f32 %v2524, %v2603
    %v2605 = vsub.f32 1.0, %v2604
    %v2606 = vmul.f32 %v2603, %v2605
    %v2607 = vadd.f32 %v2603, %v2606
    %vm2608 = vweird.f32 %v2524
    %vm2609 = vweird.f32 %v2603
    %vm2610 = vmor %vm2608, %vm2609
    %v2611 = vsel %vm2610, %v2603, %v2607
    %v2612 = vand.u32 2147483647, %v2524
    %vm2613 = vcmp.eq.f32.partialorder %v2612, 8.507059e+37
    %v2614 = vand.u32 %v2524, 2147483648
    %v2615 = vor.u32 1.1754944e-38, %v2614
    %v2616 = vsel %vm2613, %v2615, %v2611
    %v2617 = vmul.f32 1.0, %v2616
    %v2618 = vrcp.pop %v2525
    %v2619 = vmul.f32 %v2525, %v2618
    %v2620 = vsub.f32 1.0, %v2619
    %v2621 = vmul.f32 %v2618, %v2620
    %v2622 = vadd.f32 %v2618, %v2621
    %vm2623 = vweird.f32 %v2525
    %vm2624 = vweird.f32 %v2618
    %vm2625 = vmor %vm2623, %vm2624
    %v2626 = vsel %vm2625, %v2618, %v2622
    %v2627 = vand.u32 2147483647, %v2525
    %vm2628 = vcmp.eq.f32.partialorder %v2627, 8.507059e+37
    %v2629 = vand.u32 %v2525, 2147483648
    %v2630 = vor.u32 1.1754944e-38, %v2629
    %v2631 = vsel %vm2628, %v2630, %v2626
    %v2632 = vmul.f32 1.0, %v2631
    %v2633 = vrcp.pop %v2526
    %v2634 = vmul.f32 %v2526, %v2633
    %v2635 = vsub.f32 1.0, %v2634
    %v2636 = vmul.f32 %v2633, %v2635
    %v2637 = vadd.f32 %v2633, %v2636
    %vm2638 = vweird.f32 %v2526
    %vm2639 = vweird.f32 %v2633
    %vm2640 = vmor %vm2638, %vm2639
    %v2641 = vsel %vm2640, %v2633, %v2637
    %v2642 = vand.u32 2147483647, %v2526
    %vm2643 = vcmp.eq.f32.partialorder %v2642, 8.507059e+37
    %v2644 = vand.u32 %v2526, 2147483648
    %v2645 = vor.u32 1.1754944e-38, %v2644
    %v2646 = vsel %vm2643, %v2645, %v2641
    %v2647 = vmul.f32 1.0, %v2646
    %v2648 = vrcp.pop %v2527
    %v2649 = vmul.f32 %v2527, %v2648
    %v2650 = vsub.f32 1.0, %v2649
    %v2651 = vmul.f32 %v2648, %v2650
    %v2652 = vadd.f32 %v2648, %v2651
    %vm2653 = vweird.f32 %v2527
    %vm2654 = vweird.f32 %v2648
    %vm2655 = vmor %vm2653, %vm2654
    %v2656 = vsel %vm2655, %v2648, %v2652
    %v2657 = vand.u32 2147483647, %v2527
    %vm2658 = vcmp.eq.f32.partialorder %v2657, 8.507059e+37
    %v2659 = vand.u32 %v2527, 2147483648
    %v2660 = vor.u32 1.1754944e-38, %v2659
    %v2661 = vsel %vm2658, %v2660, %v2656
    %v2662 = vmul.f32 1.0, %v2661
    %2663 = vst [vmem:[%s15] sm:$0xff] %v2542
    %2664 = vst [vmem:[%s15 + $0x8] sm:$0xff] %v2557
    %2665 = vst [vmem:[%s15 + $0x10] sm:$0xff] %v2572
    %2666 = vst [vmem:[%s15 + $0x18] sm:$0xff] %v2587
    %2667 = vst [vmem:[%s15 + $0x20] sm:$0xff] %v2602
    %2668 = vst [vmem:[%s15 + $0x28] sm:$0xff] %v2617
    %2669 = vst [vmem:[%s15 + $0x30] sm:$0xff] %v2632
    %2670 = vst [vmem:[%s15 + $0x38] sm:$0xff] %v2647
    %2671 = vst [vmem:[%s15 + $0x40] sm:$0x3] %v2662
    // Predicated region
    $region70: #{vm_gcn_forward.1} parent=1 // pred_check
      _
    $region71: #{vm_gcn_forward.1} parent=1 // pred_check_branch
      %2673 = sbr.rel (0) target = $region73
    $region72: #{vm_gcn_forward.1} parent=1 // pred_region
      _
    $region73: #{vm_gcn_forward.1} parent=1 // pred_fallthru
      _
    // Predicated region
    $region74: #{vm_gcn_forward.1} parent=1 // pred_check
      _
    $region75: #{vm_gcn_forward.1} parent=1 // pred_check_branch
      %2675 = sbr.rel (0) target = $region77
    $region76: #{vm_gcn_forward.1} parent=1 // pred_region
      _
    $region77: #{vm_gcn_forward.1} parent=1 // pred_fallthru
      _
    %2676 = vsyncpa [#allocation3], 1
    %2677 = vsyncpa [#allocation5], 1

</llo_original>
